<compile_context>
chip_gen: v5e
topology: v5e:2x2
jax: 0.10.0
libtpu: 0.0.40
codegen_flags: <defaults>
</compile_context>

<pallas_src>
import jax
import jax.numpy as jnp
from jax.experimental import pallas as pl
from jax.experimental.pallas import tpu as pltpu

_LANE = 128
_NEG_INF = -1e30


def _round_up(x, m):
    return ((x + m - 1) // m) * m


def _cdiv(a, b):
    return -(-a // b)


# ----------------------------------------------------------------------------
# GRU recurrent kernel: S-chunked grid, lax.fori_loop over time inside, hidden
# state carried in the resident final-hidden output block. bf16 recurrent
# matmul, f32 gate math, bf16 state outputs.
# ----------------------------------------------------------------------------
def _gru_time_chunk(S, Bp, Hp, max_chunk=64, vmem_budget=12 << 20):
    """Pick a time chunk so the double-buffered f32 gate block + bf16 output
    block fit a conservative VMEM budget, and pad S up to a multiple of it
    (robust for awkward/prime S; grid overhead stays ~S/64 steps)."""
    per_step = Bp * Hp * (3 * 4 + 2) * 2          # 2x buffering (gates + out)
    cap = max(1, vmem_budget // max(per_step, 1))
    target = max(1, min(max_chunk, cap, S))
    n_chunks = _cdiv(S, target)
    tc = _cdiv(S, n_chunks)
    return tc, n_chunks * tc


def gru_forward(gates_x, h0, whh_f, bhh_n, *, tc, s_true):
    """Recurrent part of a GRU with the input-to-hidden work hoisted out.

    gates_x : (S_pad, Bp, 3*Hp) f32, time-major = x @ Wih_fused + folded biases
    h0      : (Bp, Hp) f32
    whh_f   : (Hp, 3*Hp) bf16 fused hidden-to-hidden weights (r|z|n)
    bhh_n   : (1, Hp) f32  n-gate hidden bias (multiplied by r)
    Returns (states (S_pad, Bp, Hp) bf16, final hidden (Bp, Hp) f32).
    """
    S_pad, Bp, G = gates_x.shape
    Hp = h0.shape[-1]
    n_chunks = S_pad // tc
    masked = S_pad != s_true          # zero-padded tail steps freeze the state
    unroll = min(tc, 8)

    def kernel(gx_ref, h0_ref, whh_ref, bhn_ref, out_ref, hT_ref):
        c = pl.program_id(0)

        @pl.when(c == 0)
        def _():
            hT_ref[...] = h0_ref[...]      # hidden lives in the resident block

        whh = whh_ref[...]                 # (Hp, 3Hp) bf16
        bhn = bhn_ref[...]                 # (1, Hp) f32

        def step(t, h):
            xg = gx_ref[t]                                             # (Bp, 3Hp) f32
            hg = jnp.dot(h.astype(jnp.bfloat16), whh,
                         preferred_element_type=jnp.float32)           # (Bp, 3Hp) f32
            r = jax.nn.sigmoid(xg[:, 0 * Hp:1 * Hp] + hg[:, 0 * Hp:1 * Hp])
            z = jax.nn.sigmoid(xg[:, 1 * Hp:2 * Hp] + hg[:, 1 * Hp:2 * Hp])
            n = jnp.tanh(xg[:, 2 * Hp:3 * Hp] + r * (hg[:, 2 * Hp:3 * Hp] + bhn))
            h_new = (1.0 - z) * n + z * h
            if masked:                     # padded tail: carry h unchanged
                h_new = jnp.where(c * tc + t < s_true, h_new, h)
            out_ref[t] = h_new.astype(jnp.bfloat16)
            return h_new

        hT_ref[...] = jax.lax.fori_loop(0, tc, step, hT_ref[...], unroll=unroll)

    grid_spec = pltpu.PrefetchScalarGridSpec(
        num_scalar_prefetch=0,
        grid=(n_chunks,),
        in_specs=[
            pl.BlockSpec((tc, Bp, G), lambda c: (c, 0, 0)),
            pl.BlockSpec((Bp, Hp), lambda c: (0, 0)),
            pl.BlockSpec((Hp, G), lambda c: (0, 0)),
            pl.BlockSpec((1, Hp), lambda c: (0, 0)),
        ],
        out_specs=[
            pl.BlockSpec((tc, Bp, Hp), lambda c: (c, 0, 0)),
            pl.BlockSpec((Bp, Hp), lambda c: (0, 0)),
        ],
    )
    return pl.pallas_call(
        kernel,
        out_shape=(jax.ShapeDtypeStruct((S_pad, Bp, Hp), jnp.bfloat16),
                   jax.ShapeDtypeStruct((Bp, Hp), jnp.float32)),
        grid_spec=grid_spec,
        compiler_params=pltpu.CompilerParams(
            dimension_semantics=("arbitrary",)),   # hidden carried across chunks
    )(gates_x, h0, whh_f, bhh_n)


# ----------------------------------------------------------------------------
# Dual attention: per-batch contexts over title / prev-draft encoder states.
# Batch grid axis "parallel" (megacore). bf16 MXU inputs, f32 softmax.
# ----------------------------------------------------------------------------
def _attn_kernel(dec_ref, enc_ref, pg_ref, c1_ref, c2_ref):
    dec = dec_ref[...]   # (1, T, Hp) bf16
    enc = enc_ref[...]   # (1, S, Hp) bf16
    pg = pg_ref[...]     # (1, P, Hp) bf16

    s1 = jnp.einsum('bth,bsh->bts', dec, enc,
                    preferred_element_type=jnp.float32)
    p1 = jnp.exp(s1 - s1.max(-1, keepdims=True))
    p1 = p1 * pl.reciprocal(p1.sum(-1, keepdims=True), approx=True)
    c1 = jnp.einsum('bts,bsh->bth', p1.astype(jnp.bfloat16), enc,
                    preferred_element_type=jnp.float32)

    s2 = jnp.einsum('bth,bph->btp', dec, pg,
                    preferred_element_type=jnp.float32)
    p2 = jnp.exp(s2 - s2.max(-1, keepdims=True))
    p2 = p2 * pl.reciprocal(p2.sum(-1, keepdims=True), approx=True)
    c2 = jnp.einsum('btp,bph->bth', p2.astype(jnp.bfloat16), pg,
                    preferred_element_type=jnp.float32)

    c1_ref[...] = c1.astype(jnp.bfloat16)
    c2_ref[...] = c2.astype(jnp.bfloat16)


def attn_contexts(dec_bm, enc_bm, pg_bm):
    B, T, Hp = dec_bm.shape
    S = enc_bm.shape[1]
    P = pg_bm.shape[1]
    grid_spec = pltpu.PrefetchScalarGridSpec(
        num_scalar_prefetch=0,
        grid=(B,),
        in_specs=[
            pl.BlockSpec((1, T, Hp), lambda b: (b, 0, 0)),
            pl.BlockSpec((1, S, Hp), lambda b: (b, 0, 0)),
            pl.BlockSpec((1, P, Hp), lambda b: (b, 0, 0)),
        ],
        out_specs=[
            pl.BlockSpec((1, T, Hp), lambda b: (b, 0, 0)),
            pl.BlockSpec((1, T, Hp), lambda b: (b, 0, 0)),
        ],
    )
    return pl.pallas_call(
        _attn_kernel,
        out_shape=(jax.ShapeDtypeStruct((B, T, Hp), jnp.bfloat16),
                   jax.ShapeDtypeStruct((B, T, Hp), jnp.bfloat16)),
        grid_spec=grid_spec,
        compiler_params=pltpu.CompilerParams(
            dimension_semantics=("parallel",)),
    )(dec_bm, enc_bm, pg_bm)


# ----------------------------------------------------------------------------
# V-tiled fused output projection with online logsumexp.
#   logits = dec@W_dec + c1@W_c1 + c2@W_c2 + bias   (three accumulated matmuls)
#   lse    = logsumexp over V (running max/sum in resident scratch).
# ----------------------------------------------------------------------------
def _proj_kernel(dec_ref, c1_ref, c2_ref, wd_ref, w1_ref, w2_ref, b_ref,
                 logits_ref, lse_ref, m_sc, l_sc):
    v = pl.program_id(1)

    @pl.when(v == 0)
    def _():
        m_sc[...] = jnp.full_like(m_sc, -jnp.inf)
        l_sc[...] = jnp.zeros_like(l_sc)

    logits = jnp.dot(dec_ref[...], wd_ref[...], preferred_element_type=jnp.float32)
    logits = logits + jnp.dot(c1_ref[...], w1_ref[...], preferred_element_type=jnp.float32)
    logits = logits + jnp.dot(c2_ref[...], w2_ref[...], preferred_element_type=jnp.float32)
    logits = logits + b_ref[...]
    logits_ref[...] = logits

    m_prev = m_sc[...]
    m_new = jnp.maximum(m_prev, logits.max(axis=-1, keepdims=True))
    l_sc[...] = (l_sc[...] * jnp.exp(m_prev - m_new)
                 + jnp.exp(logits - m_new).sum(axis=-1, keepdims=True))
    m_sc[...] = m_new

    @pl.when(v == pl.num_programs(1) - 1)
    def _():
        lse_ref[...] = m_sc[...] + jnp.log(l_sc[...])


def project_logsumexp(dec_f, c1_f, c2_f, wd, w1, w2, bias, tv):
    M, Hp = dec_f.shape
    Vp = wd.shape[1]
    nm = _cdiv(M, 256)
    tm = _round_up(_cdiv(M, nm), 8)
    Mp = nm * tm
    if Mp != M:
        def pad(x):
            return jnp.zeros((Mp, Hp), x.dtype).at[:M].set(x)
        dec_f, c1_f, c2_f = pad(dec_f), pad(c1_f), pad(c2_f)
    nv = Vp // tv

    grid_spec = pltpu.PrefetchScalarGridSpec(
        num_scalar_prefetch=0,
        grid=(nm, nv),
        in_specs=[
            pl.BlockSpec((tm, Hp), lambda m, v: (m, 0)),
            pl.BlockSpec((tm, Hp), lambda m, v: (m, 0)),
            pl.BlockSpec((tm, Hp), lambda m, v: (m, 0)),
            pl.BlockSpec((Hp, tv), lambda m, v: (0, v)),
            pl.BlockSpec((Hp, tv), lambda m, v: (0, v)),
            pl.BlockSpec((Hp, tv), lambda m, v: (0, v)),
            pl.BlockSpec((1, tv), lambda m, v: (0, v)),
        ],
        out_specs=[
            pl.BlockSpec((tm, tv), lambda m, v: (m, v)),
            pl.BlockSpec((tm, 1), lambda m, v: (m, 0)),
        ],
        scratch_shapes=[pltpu.VMEM((tm, 1), jnp.float32),
                        pltpu.VMEM((tm, 1), jnp.float32)],
    )
    logits, lse = pl.pallas_call(
        _proj_kernel,
        out_shape=(jax.ShapeDtypeStruct((Mp, Vp), jnp.float32),
                   jax.ShapeDtypeStruct((Mp, 1), jnp.float32)),
        grid_spec=grid_spec,
        compiler_params=pltpu.CompilerParams(
            dimension_semantics=("parallel", "arbitrary")),
    )(dec_f, c1_f, c2_f, wd, w1, w2, bias)
    return logits, lse, Mp


# ----------------------------------------------------------------------------
# WritingEditingNetwork wrapper
# ----------------------------------------------------------------------------
class WritingEditingNetworkPallas:
    def __init__(self, vocab_size, embed_size, hidden_size, key):
        self.V, self.E, self.H = vocab_size, embed_size, hidden_size
        self.Hp = _round_up(hidden_size, _LANE)
        vp0 = _round_up(vocab_size, _LANE)
        self.tv = min(512, vp0)
        self.Vp = _round_up(vp0, self.tv)

        ks = jax.random.split(key, 16)
        sc = 0.1

        def w(k, shape):
            return (sc * jax.random.normal(k, shape)).astype(jnp.float32)

        # title encoder (encoder_title): embedding + GRU
        self.emb_title = w(ks[0], (vocab_size, embed_size))
        self.t_wih, self.t_whh, self.t_bx, self.t_bhn = self._fuse_gru(
            w(ks[1], (3, embed_size, hidden_size)),
            w(ks[2], (3, hidden_size, hidden_size)),
            w(ks[3], (3, hidden_size)), w(ks[4], (3, hidden_size)))

        # previous-draft encoder (encoder): embedding + GRU
        self.emb_prev = w(ks[5], (vocab_size, embed_size))
        self.p_wih, self.p_whh, self.p_bx, self.p_bhn = self._fuse_gru(
            w(ks[6], (3, embed_size, hidden_size)),
            w(ks[7], (3, hidden_size, hidden_size)),
            w(ks[8], (3, hidden_size)), w(ks[9], (3, hidden_size)))

        # decoder: embedding + GRU (zero biases) + dual-attention projection
        self.emb_dec = w(ks[10], (vocab_size, embed_size))
        self.d_wih, self.d_whh, self.d_bx, self.d_bhn = self._fuse_gru(
            w(ks[11], (3, embed_size, hidden_size)),
            w(ks[12], (3, hidden_size, hidden_size)),
            jnp.zeros((3, hidden_size), jnp.float32),
            jnp.zeros((3, hidden_size), jnp.float32))

        # output projection blocks (bf16 MXU weights), lane/sublane padded
        def pad_proj(k):
            m = jnp.zeros((self.Hp, self.Vp), jnp.float32)
            m = m.at[:self.H, :self.V].set(w(k, (hidden_size, vocab_size)))
            return m.astype(jnp.bfloat16)

        self.w_dec = pad_proj(ks[13])
        self.w_c1 = pad_proj(ks[14])
        self.w_c2 = pad_proj(ks[15])
        # padded vocab columns get -1e30 bias -> excluded from log_softmax
        self.b_out = jnp.full((1, self.Vp), _NEG_INF, jnp.float32).at[
            :, :self.V].set(0.0)

    def _fuse_gru(self, wih, whh, bih, bhh):
        """Fuse per-gate GRU params (order r|z|n) into lane-padded layouts:
        wih_f (E,3Hp) bf16, whh_f (Hp,3Hp) bf16, folded input-side bias
        (1,3Hp) f32 = [b_ir+b_hr | b_iz+b_hz | b_in], bhh_n (1,Hp) f32.
        Zero pads keep padded hidden units exactly 0 through the recurrence."""
        H, Hp, E = self.H, self.Hp, self.E
        wih_f = jnp.zeros((E, 3 * Hp), jnp.float32)
        whh_f = jnp.zeros((Hp, 3 * Hp), jnp.float32)
        bx_f = jnp.zeros((1, 3 * Hp), jnp.float32)
        bx = [bih[0] + bhh[0], bih[1] + bhh[1], bih[2]]
        for g in range(3):
            wih_f = wih_f.at[:, g * Hp:g * Hp + H].set(wih[g])
            whh_f = whh_f.at[:H, g * Hp:g * Hp + H].set(whh[g])
            bx_f = bx_f.at[:, g * Hp:g * Hp + H].set(bx[g])
        bhn = jnp.zeros((1, Hp), jnp.float32).at[:, :H].set(bhh[2])
        return wih_f.astype(jnp.bfloat16), whh_f.astype(jnp.bfloat16), bx_f, bhn

    def _run_gru(self, tokens, emb, wih_f, whh_f, bx_f, bhn, h0=None):
        B, S = tokens.shape
        Bp = _round_up(B, 8)                       # sublane-dense batch
        if Bp != B:
            tokens = jnp.zeros((Bp, S), tokens.dtype).at[:B].set(tokens)
        # Time-major embedding lookup (transpose cheap int ids, not floats).
        x = jnp.take(emb, tokens.T, axis=0)                      # (S, Bp, E)
        # Hoisted input-to-hidden projection for all gates & steps (one big
        # bf16 matmul, f32 accumulation), biases folded in.
        gates_x = jnp.einsum('sbe,eg->sbg', x.astype(jnp.bfloat16), wih_f,
                             preferred_element_type=jnp.float32) + bx_f
        tc, S_pad = _gru_time_chunk(S, Bp, self.Hp)
        if S_pad != S:
            gates_x = jnp.concatenate(
                [gates_x, jnp.zeros((S_pad - S, Bp, 3 * self.Hp), gates_x.dtype)],
                axis=0)
        if h0 is None:
            h0 = jnp.zeros((Bp, self.Hp), jnp.float32)
        outs, h_final = gru_forward(gates_x, h0, whh_f, bhn, tc=tc, s_true=S)
        if S_pad != S:
            outs = outs[:S]
        return outs, h_final            # (S, Bp, Hp) bf16, (Bp, Hp) f32

    def forward(self, input_variable, prev_generated_seq=None,
                input_lengths=None, target_variable=None,
                teacher_forcing_ratio=0):
        # TODO(synk): input_lengths (pack_padded_sequence masking) is ignored.
        B = input_variable.shape[0]
        Hp = self.Hp

        enc_states, enc_hidden = self._run_gru(
            input_variable, self.emb_title,
            self.t_wih, self.t_whh, self.t_bx, self.t_bhn)

        if prev_generated_seq is None:
            # TODO(synk): reference decoder gets pg_encoder_states=None; we
            # emulate it by attending over all-zero states (context == 0).
            pg_bm = jnp.zeros((B, 8, Hp), jnp.bfloat16)
        else:
            pg_states, _ = self._run_gru(
                prev_generated_seq, self.emb_prev,
                self.p_wih, self.p_whh, self.p_bx, self.p_bhn)
            pg_bm = jnp.transpose(pg_states[:, :B], (1, 0, 2))   # (B, P, Hp) bf16

        # TODO(synk): greedy (non-teacher-forced) rollout not implemented;
        # the decoder GRU is run teacher-forced over target_variable.
        dec_states, dec_hidden = self._run_gru(
            target_variable, self.emb_dec,
            self.d_wih, self.d_whh, self.d_bx, self.d_bhn, h0=enc_hidden)

        # Small bf16 re-layouts (time-major -> batch-major) for attention /
        # projection; half the bytes of the old f32 transposes.
        enc_bm = jnp.transpose(enc_states[:, :B], (1, 0, 2))     # (B, S, Hp)
        dec_bm = jnp.transpose(dec_states[:, :B], (1, 0, 2))     # (B, T, Hp)

        c1, c2 = attn_contexts(dec_bm, enc_bm, pg_bm)            # (B, T, Hp) bf16
        T = dec_bm.shape[1]
        M = B * T
        dec_f = dec_bm.reshape(M, Hp)
        c1_f = c1.reshape(M, Hp)
        c2_f = c2.reshape(M, Hp)

        logits, lse, Mp = project_logsumexp(
            dec_f, c1_f, c2_f, self.w_dec, self.w_c1, self.w_c2,
            self.b_out, self.tv)
        log_probs = logits - lse                                 # log_softmax
        if Mp != M:
            log_probs = log_probs[:M]
        log_probs = log_probs.reshape(B, T, self.Vp)
        # Note: returned over the lane-padded vocab Vp; pad columns are exact
        # (-1e30 bias -> ~ -1e30 log-prob, zero probability), so downstream
        # losses can mask instead of paying an HBM copy to slice to V.
        return log_probs, dec_hidden[:B, :self.H]


if __name__ == "__main__":
    B, S_TITLE, S_PREV, T_TGT = 2, 8, 8, 8
    VOCAB, EMBED, HIDDEN = 32, 16, 32

    key = jax.random.PRNGKey(0)
    k_param, k_in, k_prev, k_tgt = jax.random.split(key, 4)

    net = WritingEditingNetworkPallas(VOCAB, EMBED, HIDDEN, k_param)

    input_variable = jax.random.randint(k_in, (B, S_TITLE), 0, VOCAB, jnp.int32)
    prev_generated_seq = jax.random.randint(k_prev, (B, S_PREV), 0, VOCAB, jnp.int32)
    target_variable = jax.random.randint(k_tgt, (B, T_TGT), 0, VOCAB, jnp.int32)

    # second-draft path (prev draft provided)
    log_probs, dec_hidden = net.forward(
        input_variable, prev_generated_seq, None, target_variable, 0)
    jax.block_until_ready((log_probs, dec_hidden))

    assert log_probs.shape == (B, T_TGT, net.Vp)
    assert dec_hidden.shape == (B, HIDDEN)
    lp_v = log_probs[:, :, :VOCAB]
    assert bool(jnp.all(jnp.isfinite(lp_v)))
    # log_softmax must normalize to 1 over the true vocab despite lane padding
    assert bool(jnp.allclose(jnp.exp(lp_v).sum(-1), 1.0, atol=1e-3))

    # first-draft path (prev_generated_seq is None)
    log_probs0, _ = net.forward(input_variable, None, None, target_variable, 0)
    jax.block_until_ready(log_probs0)
    lp0_v = log_probs0[:, :, :VOCAB]
    assert bool(jnp.all(jnp.isfinite(lp0_v)))
    assert bool(jnp.allclose(jnp.exp(lp0_v).sum(-1), 1.0, atol=1e-3))

    print("KERNEL_OK")
</pallas_src>

<mosaic_0001>
module attributes {stable_mosaic.version = 11 : i64} {
  func.func @kernel(%arg0: i32, %arg1: memref<8x8x384xf32, #tpu.memory_space<vmem>>, %arg2: memref<8x128xf32, #tpu.memory_space<vmem>>, %arg3: memref<128x384xbf16, #tpu.memory_space<vmem>>, %arg4: memref<1x128xf32, #tpu.memory_space<vmem>>, %arg5: memref<8x8x128xbf16, #tpu.memory_space<vmem>>, %arg6: memref<8x128xf32, #tpu.memory_space<vmem>>) attributes {dimension_semantics = [#tpu.dimension_semantics<arbitrary>], iteration_bounds = array<i64: 1>, scalar_prefetch = 0 : i64, scratch_operands = 0 : i64, tpu.core_type = #tpu.core_type<tc>, window_params = [{transform_indices = @transform_0, window_bounds = array<i64: 8, 8, 384>}, {pipeline_mode = #tpu.pipeline_mode<synchronous>, transform_indices = @transform_1, window_bounds = array<i64: 8, 128>}, {pipeline_mode = #tpu.pipeline_mode<synchronous>, transform_indices = @transform_2, window_bounds = array<i64: 128, 384>}, {pipeline_mode = #tpu.pipeline_mode<synchronous>, transform_indices = @transform_3, window_bounds = array<i64: 1, 128>}, {transform_indices = @transform_4, window_bounds = array<i64: 8, 8, 128>}, {pipeline_mode = #tpu.pipeline_mode<synchronous>, transform_indices = @transform_5, window_bounds = array<i64: 8, 128>}]} {
    %c0_i32 = arith.constant 0 : i32
    %0 = arith.cmpi eq, %arg0, %c0_i32 : i32
    %1 = arith.extui %0 : i1 to i32
    %c0_i32_0 = arith.constant 0 : i32
    %2 = arith.cmpi ne, %1, %c0_i32_0 : i32
    scf.if %2 {
      %c0_72 = arith.constant 0 : index
      %c0_73 = arith.constant 0 : index
      %311 = vector.load %arg2[%c0_72, %c0_73] : memref<8x128xf32, #tpu.memory_space<vmem>>, vector<8x128xf32>
      %c0_74 = arith.constant 0 : index
      %c0_75 = arith.constant 0 : index
      %312 = vector.load %arg6[%c0_74, %c0_75] : memref<8x128xf32, #tpu.memory_space<vmem>>, vector<8x128xf32>
      tpu.vector_store %arg6[%c0_74, %c0_75], %311 {strides = array<i32>} : memref<8x128xf32, #tpu.memory_space<vmem>>, vector<8x128xf32>,
    } else {
    }
    %c0 = arith.constant 0 : index
    %c0_1 = arith.constant 0 : index
    %3 = vector.load %arg3[%c0, %c0_1] : memref<128x384xbf16, #tpu.memory_space<vmem>>, vector<128x384xbf16>
    %c0_2 = arith.constant 0 : index
    %c0_3 = arith.constant 0 : index
    %4 = vector.load %arg4[%c0_2, %c0_3] : memref<1x128xf32, #tpu.memory_space<vmem>>, vector<1x128xf32>
    %c0_4 = arith.constant 0 : index
    %c0_5 = arith.constant 0 : index
    %5 = vector.load %arg6[%c0_4, %c0_5] : memref<8x128xf32, #tpu.memory_space<vmem>>, vector<8x128xf32>
    %c0_i32_6 = arith.constant 0 : i32
    %6 = arith.index_cast %c0_i32_6 : i32 to index
    %c0_7 = arith.constant 0 : index
    %c0_8 = arith.constant 0 : index
    %7 = vector.load %arg1[%6, %c0_7, %c0_8] : memref<8x8x384xf32, #tpu.memory_space<vmem>>, vector<1x8x384xf32>
    %8 = vector.shape_cast %7 : vector<1x8x384xf32> to vector<8x384xf32>
    %9 = arith.truncf %5 : vector<8x128xf32> to vector<8x128xbf16>
    %cst = arith.constant dense<0.000000e+00> : vector<8x384xf32>
    %10 = tpu.matmul %9, %3, %cst {dimension_numbers = #tpu.dot_dimension_numbers<[1], [0], [0], [1], [0, 0, 1, 1], [], []>} : vector<8x128xbf16>, vector<128x384xbf16>, vector<8x384xf32> -> vector<8x384xf32>
    %11 = vector.extract_strided_slice %8 {offsets = [0, 0], sizes = [8, 128], strides = [1, 1]} : vector<8x384xf32> to vector<8x128xf32>
    %12 = vector.extract_strided_slice %10 {offsets = [0, 0], sizes = [8, 128], strides = [1, 1]} : vector<8x384xf32> to vector<8x128xf32>
    %13 = arith.addf %11, %12 : vector<8x128xf32>
    %14 = arith.negf %13 : vector<8x128xf32>
    %15 = math.exp %14 : vector<8x128xf32>
    %cst_9 = arith.constant 1.000000e+00 : f32
    %16 = vector.broadcast %cst_9 : f32 to vector<8x128xf32>
    %17 = arith.addf %16, %15 : vector<8x128xf32>
    %18 = arith.divf %16, %17 : vector<8x128xf32>
    %19 = vector.extract_strided_slice %8 {offsets = [0, 128], sizes = [8, 128], strides = [1, 1]} : vector<8x384xf32> to vector<8x128xf32>
    %20 = vector.extract_strided_slice %10 {offsets = [0, 128], sizes = [8, 128], strides = [1, 1]} : vector<8x384xf32> to vector<8x128xf32>
    %21 = arith.addf %19, %20 : vector<8x128xf32>
    %22 = arith.negf %21 : vector<8x128xf32>
    %23 = math.exp %22 : vector<8x128xf32>
    %cst_10 = arith.constant 1.000000e+00 : f32
    %24 = vector.broadcast %cst_10 : f32 to vector<8x128xf32>
    %25 = arith.addf %24, %23 : vector<8x128xf32>
    %26 = arith.divf %24, %25 : vector<8x128xf32>
    %27 = vector.extract_strided_slice %8 {offsets = [0, 256], sizes = [8, 128], strides = [1, 1]} : vector<8x384xf32> to vector<8x128xf32>
    %28 = vector.extract_strided_slice %10 {offsets = [0, 256], sizes = [8, 128], strides = [1, 1]} : vector<8x384xf32> to vector<8x128xf32>
    %29 = vector.broadcast %4 : vector<1x128xf32> to vector<8x128xf32>
    %30 = arith.addf %28, %29 : vector<8x128xf32>
    %31 = arith.mulf %18, %30 : vector<8x128xf32>
    %32 = arith.addf %27, %31 : vector<8x128xf32>
    %33 = math.tanh %32 : vector<8x128xf32>
    %cst_11 = arith.constant 1.000000e+00 : f32
    %34 = vector.broadcast %cst_11 : f32 to vector<8x128xf32>
    %35 = arith.subf %34, %26 : vector<8x128xf32>
    %36 = arith.mulf %35, %33 : vector<8x128xf32>
    %37 = arith.mulf %26, %5 : vector<8x128xf32>
    %38 = arith.addf %36, %37 : vector<8x128xf32>
    %39 = arith.truncf %38 : vector<8x128xf32> to vector<8x128xbf16>
    %40 = arith.index_cast %c0_i32_6 : i32 to index
    %c0_12 = arith.constant 0 : index
    %c0_13 = arith.constant 0 : index
    %41 = vector.load %arg5[%40, %c0_12, %c0_13] : memref<8x8x128xbf16, #tpu.memory_space<vmem>>, vector<1x8x128xbf16>
    %42 = vector.shape_cast %41 : vector<1x8x128xbf16> to vector<8x128xbf16>
    %43 = vector.shape_cast %39 : vector<8x128xbf16> to vector<1x8x128xbf16>
    tpu.vector_store %arg5[%40, %c0_12, %c0_13], %43 {strides = array<i32>} : memref<8x8x128xbf16, #tpu.memory_space<vmem>>, vector<1x8x128xbf16>,
    %c1_i32 = arith.constant 1 : i32
    %44 = arith.index_cast %c1_i32 : i32 to index
    %c0_14 = arith.constant 0 : index
    %c0_15 = arith.constant 0 : index
    %45 = vector.load %arg1[%44, %c0_14, %c0_15] : memref<8x8x384xf32, #tpu.memory_space<vmem>>, vector<1x8x384xf32>
    %46 = vector.shape_cast %45 : vector<1x8x384xf32> to vector<8x384xf32>
    %47 = arith.truncf %38 : vector<8x128xf32> to vector<8x128xbf16>
    %cst_16 = arith.constant dense<0.000000e+00> : vector<8x384xf32>
    %48 = tpu.matmul %47, %3, %cst_16 {dimension_numbers = #tpu.dot_dimension_numbers<[1], [0], [0], [1], [0, 0, 1, 1], [], []>} : vector<8x128xbf16>, vector<128x384xbf16>, vector<8x384xf32> -> vector<8x384xf32>
    %49 = vector.extract_strided_slice %46 {offsets = [0, 0], sizes = [8, 128], strides = [1, 1]} : vector<8x384xf32> to vector<8x128xf32>
    %50 = vector.extract_strided_slice %48 {offsets = [0, 0], sizes = [8, 128], strides = [1, 1]} : vector<8x384xf32> to vector<8x128xf32>
    %51 = arith.addf %49, %50 : vector<8x128xf32>
    %52 = arith.negf %51 : vector<8x128xf32>
    %53 = math.exp %52 : vector<8x128xf32>
    %cst_17 = arith.constant 1.000000e+00 : f32
    %54 = vector.broadcast %cst_17 : f32 to vector<8x128xf32>
    %55 = arith.addf %54, %53 : vector<8x128xf32>
    %56 = arith.divf %54, %55 : vector<8x128xf32>
    %57 = vector.extract_strided_slice %46 {offsets = [0, 128], sizes = [8, 128], strides = [1, 1]} : vector<8x384xf32> to vector<8x128xf32>
    %58 = vector.extract_strided_slice %48 {offsets = [0, 128], sizes = [8, 128], strides = [1, 1]} : vector<8x384xf32> to vector<8x128xf32>
    %59 = arith.addf %57, %58 : vector<8x128xf32>
    %60 = arith.negf %59 : vector<8x128xf32>
    %61 = math.exp %60 : vector<8x128xf32>
    %cst_18 = arith.constant 1.000000e+00 : f32
    %62 = vector.broadcast %cst_18 : f32 to vector<8x128xf32>
    %63 = arith.addf %62, %61 : vector<8x128xf32>
    %64 = arith.divf %62, %63 : vector<8x128xf32>
    %65 = vector.extract_strided_slice %46 {offsets = [0, 256], sizes = [8, 128], strides = [1, 1]} : vector<8x384xf32> to vector<8x128xf32>
    %66 = vector.extract_strided_slice %48 {offsets = [0, 256], sizes = [8, 128], strides = [1, 1]} : vector<8x384xf32> to vector<8x128xf32>
    %67 = vector.broadcast %4 : vector<1x128xf32> to vector<8x128xf32>
    %68 = arith.addf %66, %67 : vector<8x128xf32>
    %69 = arith.mulf %56, %68 : vector<8x128xf32>
    %70 = arith.addf %65, %69 : vector<8x128xf32>
    %71 = math.tanh %70 : vector<8x128xf32>
    %cst_19 = arith.constant 1.000000e+00 : f32
    %72 = vector.broadcast %cst_19 : f32 to vector<8x128xf32>
    %73 = arith.subf %72, %64 : vector<8x128xf32>
    %74 = arith.mulf %73, %71 : vector<8x128xf32>
    %75 = arith.mulf %64, %38 : vector<8x128xf32>
    %76 = arith.addf %74, %75 : vector<8x128xf32>
    %77 = arith.truncf %76 : vector<8x128xf32> to vector<8x128xbf16>
    %78 = arith.index_cast %c1_i32 : i32 to index
    %c0_20 = arith.constant 0 : index
    %c0_21 = arith.constant 0 : index
    %79 = vector.load %arg5[%78, %c0_20, %c0_21] : memref<8x8x128xbf16, #tpu.memory_space<vmem>>, vector<1x8x128xbf16>
    %80 = vector.shape_cast %79 : vector<1x8x128xbf16> to vector<8x128xbf16>
    %81 = vector.shape_cast %77 : vector<8x128xbf16> to vector<1x8x128xbf16>
    tpu.vector_store %arg5[%78, %c0_20, %c0_21], %81 {strides = array<i32>} : memref<8x8x128xbf16, #tpu.memory_space<vmem>>, vector<1x8x128xbf16>,
    %c2_i32 = arith.constant 2 : i32
    %82 = arith.index_cast %c2_i32 : i32 to index
    %c0_22 = arith.constant 0 : index
    %c0_23 = arith.constant 0 : index
    %83 = vector.load %arg1[%82, %c0_22, %c0_23] : memref<8x8x384xf32, #tpu.memory_space<vmem>>, vector<1x8x384xf32>
    %84 = vector.shape_cast %83 : vector<1x8x384xf32> to vector<8x384xf32>
    %85 = arith.truncf %76 : vector<8x128xf32> to vector<8x128xbf16>
    %cst_24 = arith.constant dense<0.000000e+00> : vector<8x384xf32>
    %86 = tpu.matmul %85, %3, %cst_24 {dimension_numbers = #tpu.dot_dimension_numbers<[1], [0], [0], [1], [0, 0, 1, 1], [], []>} : vector<8x128xbf16>, vector<128x384xbf16>, vector<8x384xf32> -> vector<8x384xf32>
    %87 = vector.extract_strided_slice %84 {offsets = [0, 0], sizes = [8, 128], strides = [1, 1]} : vector<8x384xf32> to vector<8x128xf32>
    %88 = vector.extract_strided_slice %86 {offsets = [0, 0], sizes = [8, 128], strides = [1, 1]} : vector<8x384xf32> to vector<8x128xf32>
    %89 = arith.addf %87, %88 : vector<8x128xf32>
    %90 = arith.negf %89 : vector<8x128xf32>
    %91 = math.exp %90 : vector<8x128xf32>
    %cst_25 = arith.constant 1.000000e+00 : f32
    %92 = vector.broadcast %cst_25 : f32 to vector<8x128xf32>
    %93 = arith.addf %92, %91 : vector<8x128xf32>
    %94 = arith.divf %92, %93 : vector<8x128xf32>
    %95 = vector.extract_strided_slice %84 {offsets = [0, 128], sizes = [8, 128], strides = [1, 1]} : vector<8x384xf32> to vector<8x128xf32>
    %96 = vector.extract_strided_slice %86 {offsets = [0, 128], sizes = [8, 128], strides = [1, 1]} : vector<8x384xf32> to vector<8x128xf32>
    %97 = arith.addf %95, %96 : vector<8x128xf32>
    %98 = arith.negf %97 : vector<8x128xf32>
    %99 = math.exp %98 : vector<8x128xf32>
    %cst_26 = arith.constant 1.000000e+00 : f32
    %100 = vector.broadcast %cst_26 : f32 to vector<8x128xf32>
    %101 = arith.addf %100, %99 : vector<8x128xf32>
    %102 = arith.divf %100, %101 : vector<8x128xf32>
    %103 = vector.extract_strided_slice %84 {offsets = [0, 256], sizes = [8, 128], strides = [1, 1]} : vector<8x384xf32> to vector<8x128xf32>
    %104 = vector.extract_strided_slice %86 {offsets = [0, 256], sizes = [8, 128], strides = [1, 1]} : vector<8x384xf32> to vector<8x128xf32>
    %105 = vector.broadcast %4 : vector<1x128xf32> to vector<8x128xf32>
    %106 = arith.addf %104, %105 : vector<8x128xf32>
    %107 = arith.mulf %94, %106 : vector<8x128xf32>
    %108 = arith.addf %103, %107 : vector<8x128xf32>
    %109 = math.tanh %108 : vector<8x128xf32>
    %cst_27 = arith.constant 1.000000e+00 : f32
    %110 = vector.broadcast %cst_27 : f32 to vector<8x128xf32>
    %111 = arith.subf %110, %102 : vector<8x128xf32>
    %112 = arith.mulf %111, %109 : vector<8x128xf32>
    %113 = arith.mulf %102, %76 : vector<8x128xf32>
    %114 = arith.addf %112, %113 : vector<8x128xf32>
    %115 = arith.truncf %114 : vector<8x128xf32> to vector<8x128xbf16>
    %116 = arith.index_cast %c2_i32 : i32 to index
    %c0_28 = arith.constant 0 : index
    %c0_29 = arith.constant 0 : index
    %117 = vector.load %arg5[%116, %c0_28, %c0_29] : memref<8x8x128xbf16, #tpu.memory_space<vmem>>, vector<1x8x128xbf16>
    %118 = vector.shape_cast %117 : vector<1x8x128xbf16> to vector<8x128xbf16>
    %119 = vector.shape_cast %115 : vector<8x128xbf16> to vector<1x8x128xbf16>
    tpu.vector_store %arg5[%116, %c0_28, %c0_29], %119 {strides = array<i32>} : memref<8x8x128xbf16, #tpu.memory_space<vmem>>, vector<1x8x128xbf16>,
    %c3_i32 = arith.constant 3 : i32
    %120 = arith.index_cast %c3_i32 : i32 to index
    %c0_30 = arith.constant 0 : index
    %c0_31 = arith.constant 0 : index
    %121 = vector.load %arg1[%120, %c0_30, %c0_31] : memref<8x8x384xf32, #tpu.memory_space<vmem>>, vector<1x8x384xf32>
    %122 = vector.shape_cast %121 : vector<1x8x384xf32> to vector<8x384xf32>
    %123 = arith.truncf %114 : vector<8x128xf32> to vector<8x128xbf16>
    %cst_32 = arith.constant dense<0.000000e+00> : vector<8x384xf32>
    %124 = tpu.matmul %123, %3, %cst_32 {dimension_numbers = #tpu.dot_dimension_numbers<[1], [0], [0], [1], [0, 0, 1, 1], [], []>} : vector<8x128xbf16>, vector<128x384xbf16>, vector<8x384xf32> -> vector<8x384xf32>
    %125 = vector.extract_strided_slice %122 {offsets = [0, 0], sizes = [8, 128], strides = [1, 1]} : vector<8x384xf32> to vector<8x128xf32>
    %126 = vector.extract_strided_slice %124 {offsets = [0, 0], sizes = [8, 128], strides = [1, 1]} : vector<8x384xf32> to vector<8x128xf32>
    %127 = arith.addf %125, %126 : vector<8x128xf32>
    %128 = arith.negf %127 : vector<8x128xf32>
    %129 = math.exp %128 : vector<8x128xf32>
    %cst_33 = arith.constant 1.000000e+00 : f32
    %130 = vector.broadcast %cst_33 : f32 to vector<8x128xf32>
    %131 = arith.addf %130, %129 : vector<8x128xf32>
    %132 = arith.divf %130, %131 : vector<8x128xf32>
    %133 = vector.extract_strided_slice %122 {offsets = [0, 128], sizes = [8, 128], strides = [1, 1]} : vector<8x384xf32> to vector<8x128xf32>
    %134 = vector.extract_strided_slice %124 {offsets = [0, 128], sizes = [8, 128], strides = [1, 1]} : vector<8x384xf32> to vector<8x128xf32>
    %135 = arith.addf %133, %134 : vector<8x128xf32>
    %136 = arith.negf %135 : vector<8x128xf32>
    %137 = math.exp %136 : vector<8x128xf32>
    %cst_34 = arith.constant 1.000000e+00 : f32
    %138 = vector.broadcast %cst_34 : f32 to vector<8x128xf32>
    %139 = arith.addf %138, %137 : vector<8x128xf32>
    %140 = arith.divf %138, %139 : vector<8x128xf32>
    %141 = vector.extract_strided_slice %122 {offsets = [0, 256], sizes = [8, 128], strides = [1, 1]} : vector<8x384xf32> to vector<8x128xf32>
    %142 = vector.extract_strided_slice %124 {offsets = [0, 256], sizes = [8, 128], strides = [1, 1]} : vector<8x384xf32> to vector<8x128xf32>
    %143 = vector.broadcast %4 : vector<1x128xf32> to vector<8x128xf32>
    %144 = arith.addf %142, %143 : vector<8x128xf32>
    %145 = arith.mulf %132, %144 : vector<8x128xf32>
    %146 = arith.addf %141, %145 : vector<8x128xf32>
    %147 = math.tanh %146 : vector<8x128xf32>
    %cst_35 = arith.constant 1.000000e+00 : f32
    %148 = vector.broadcast %cst_35 : f32 to vector<8x128xf32>
    %149 = arith.subf %148, %140 : vector<8x128xf32>
    %150 = arith.mulf %149, %147 : vector<8x128xf32>
    %151 = arith.mulf %140, %114 : vector<8x128xf32>
    %152 = arith.addf %150, %151 : vector<8x128xf32>
    %153 = arith.truncf %152 : vector<8x128xf32> to vector<8x128xbf16>
    %154 = arith.index_cast %c3_i32 : i32 to index
    %c0_36 = arith.constant 0 : index
    %c0_37 = arith.constant 0 : index
    %155 = vector.load %arg5[%154, %c0_36, %c0_37] : memref<8x8x128xbf16, #tpu.memory_space<vmem>>, vector<1x8x128xbf16>
    %156 = vector.shape_cast %155 : vector<1x8x128xbf16> to vector<8x128xbf16>
    %157 = vector.shape_cast %153 : vector<8x128xbf16> to vector<1x8x128xbf16>
    tpu.vector_store %arg5[%154, %c0_36, %c0_37], %157 {strides = array<i32>} : memref<8x8x128xbf16, #tpu.memory_space<vmem>>, vector<1x8x128xbf16>,
    %c4_i32 = arith.constant 4 : i32
    %158 = arith.index_cast %c4_i32 : i32 to index
    %c0_38 = arith.constant 0 : index
    %c0_39 = arith.constant 0 : index
    %159 = vector.load %arg1[%158, %c0_38, %c0_39] : memref<8x8x384xf32, #tpu.memory_space<vmem>>, vector<1x8x384xf32>
    %160 = vector.shape_cast %159 : vector<1x8x384xf32> to vector<8x384xf32>
    %161 = arith.truncf %152 : vector<8x128xf32> to vector<8x128xbf16>
    %cst_40 = arith.constant dense<0.000000e+00> : vector<8x384xf32>
    %162 = tpu.matmul %161, %3, %cst_40 {dimension_numbers = #tpu.dot_dimension_numbers<[1], [0], [0], [1], [0, 0, 1, 1], [], []>} : vector<8x128xbf16>, vector<128x384xbf16>, vector<8x384xf32> -> vector<8x384xf32>
    %163 = vector.extract_strided_slice %160 {offsets = [0, 0], sizes = [8, 128], strides = [1, 1]} : vector<8x384xf32> to vector<8x128xf32>
    %164 = vector.extract_strided_slice %162 {offsets = [0, 0], sizes = [8, 128], strides = [1, 1]} : vector<8x384xf32> to vector<8x128xf32>
    %165 = arith.addf %163, %164 : vector<8x128xf32>
    %166 = arith.negf %165 : vector<8x128xf32>
    %167 = math.exp %166 : vector<8x128xf32>
    %cst_41 = arith.constant 1.000000e+00 : f32
    %168 = vector.broadcast %cst_41 : f32 to vector<8x128xf32>
    %169 = arith.addf %168, %167 : vector<8x128xf32>
    %170 = arith.divf %168, %169 : vector<8x128xf32>
    %171 = vector.extract_strided_slice %160 {offsets = [0, 128], sizes = [8, 128], strides = [1, 1]} : vector<8x384xf32> to vector<8x128xf32>
    %172 = vector.extract_strided_slice %162 {offsets = [0, 128], sizes = [8, 128], strides = [1, 1]} : vector<8x384xf32> to vector<8x128xf32>
    %173 = arith.addf %171, %172 : vector<8x128xf32>
    %174 = arith.negf %173 : vector<8x128xf32>
    %175 = math.exp %174 : vector<8x128xf32>
    %cst_42 = arith.constant 1.000000e+00 : f32
    %176 = vector.broadcast %cst_42 : f32 to vector<8x128xf32>
    %177 = arith.addf %176, %175 : vector<8x128xf32>
    %178 = arith.divf %176, %177 : vector<8x128xf32>
    %179 = vector.extract_strided_slice %160 {offsets = [0, 256], sizes = [8, 128], strides = [1, 1]} : vector<8x384xf32> to vector<8x128xf32>
    %180 = vector.extract_strided_slice %162 {offsets = [0, 256], sizes = [8, 128], strides = [1, 1]} : vector<8x384xf32> to vector<8x128xf32>
    %181 = vector.broadcast %4 : vector<1x128xf32> to vector<8x128xf32>
    %182 = arith.addf %180, %181 : vector<8x128xf32>
    %183 = arith.mulf %170, %182 : vector<8x128xf32>
    %184 = arith.addf %179, %183 : vector<8x128xf32>
    %185 = math.tanh %184 : vector<8x128xf32>
    %cst_43 = arith.constant 1.000000e+00 : f32
    %186 = vector.broadcast %cst_43 : f32 to vector<8x128xf32>
    %187 = arith.subf %186, %178 : vector<8x128xf32>
    %188 = arith.mulf %187, %185 : vector<8x128xf32>
    %189 = arith.mulf %178, %152 : vector<8x128xf32>
    %190 = arith.addf %188, %189 : vector<8x128xf32>
    %191 = arith.truncf %190 : vector<8x128xf32> to vector<8x128xbf16>
    %192 = arith.index_cast %c4_i32 : i32 to index
    %c0_44 = arith.constant 0 : index
    %c0_45 = arith.constant 0 : index
    %193 = vector.load %arg5[%192, %c0_44, %c0_45] : memref<8x8x128xbf16, #tpu.memory_space<vmem>>, vector<1x8x128xbf16>
    %194 = vector.shape_cast %193 : vector<1x8x128xbf16> to vector<8x128xbf16>
    %195 = vector.shape_cast %191 : vector<8x128xbf16> to vector<1x8x128xbf16>
    tpu.vector_store %arg5[%192, %c0_44, %c0_45], %195 {strides = array<i32>} : memref<8x8x128xbf16, #tpu.memory_space<vmem>>, vector<1x8x128xbf16>,
    %c5_i32 = arith.constant 5 : i32
    %196 = arith.index_cast %c5_i32 : i32 to index
    %c0_46 = arith.constant 0 : index
    %c0_47 = arith.constant 0 : index
    %197 = vector.load %arg1[%196, %c0_46, %c0_47] : memref<8x8x384xf32, #tpu.memory_space<vmem>>, vector<1x8x384xf32>
    %198 = vector.shape_cast %197 : vector<1x8x384xf32> to vector<8x384xf32>
    %199 = arith.truncf %190 : vector<8x128xf32> to vector<8x128xbf16>
    %cst_48 = arith.constant dense<0.000000e+00> : vector<8x384xf32>
    %200 = tpu.matmul %199, %3, %cst_48 {dimension_numbers = #tpu.dot_dimension_numbers<[1], [0], [0], [1], [0, 0, 1, 1], [], []>} : vector<8x128xbf16>, vector<128x384xbf16>, vector<8x384xf32> -> vector<8x384xf32>
    %201 = vector.extract_strided_slice %198 {offsets = [0, 0], sizes = [8, 128], strides = [1, 1]} : vector<8x384xf32> to vector<8x128xf32>
    %202 = vector.extract_strided_slice %200 {offsets = [0, 0], sizes = [8, 128], strides = [1, 1]} : vector<8x384xf32> to vector<8x128xf32>
    %203 = arith.addf %201, %202 : vector<8x128xf32>
    %204 = arith.negf %203 : vector<8x128xf32>
    %205 = math.exp %204 : vector<8x128xf32>
    %cst_49 = arith.constant 1.000000e+00 : f32
    %206 = vector.broadcast %cst_49 : f32 to vector<8x128xf32>
    %207 = arith.addf %206, %205 : vector<8x128xf32>
    %208 = arith.divf %206, %207 : vector<8x128xf32>
    %209 = vector.extract_strided_slice %198 {offsets = [0, 128], sizes = [8, 128], strides = [1, 1]} : vector<8x384xf32> to vector<8x128xf32>
    %210 = vector.extract_strided_slice %200 {offsets = [0, 128], sizes = [8, 128], strides = [1, 1]} : vector<8x384xf32> to vector<8x128xf32>
    %211 = arith.addf %209, %210 : vector<8x128xf32>
    %212 = arith.negf %211 : vector<8x128xf32>
    %213 = math.exp %212 : vector<8x128xf32>
    %cst_50 = arith.constant 1.000000e+00 : f32
    %214 = vector.broadcast %cst_50 : f32 to vector<8x128xf32>
    %215 = arith.addf %214, %213 : vector<8x128xf32>
    %216 = arith.divf %214, %215 : vector<8x128xf32>
    %217 = vector.extract_strided_slice %198 {offsets = [0, 256], sizes = [8, 128], strides = [1, 1]} : vector<8x384xf32> to vector<8x128xf32>
    %218 = vector.extract_strided_slice %200 {offsets = [0, 256], sizes = [8, 128], strides = [1, 1]} : vector<8x384xf32> to vector<8x128xf32>
    %219 = vector.broadcast %4 : vector<1x128xf32> to vector<8x128xf32>
    %220 = arith.addf %218, %219 : vector<8x128xf32>
    %221 = arith.mulf %208, %220 : vector<8x128xf32>
    %222 = arith.addf %217, %221 : vector<8x128xf32>
    %223 = math.tanh %222 : vector<8x128xf32>
    %cst_51 = arith.constant 1.000000e+00 : f32
    %224 = vector.broadcast %cst_51 : f32 to vector<8x128xf32>
    %225 = arith.subf %224, %216 : vector<8x128xf32>
    %226 = arith.mulf %225, %223 : vector<8x128xf32>
    %227 = arith.mulf %216, %190 : vector<8x128xf32>
    %228 = arith.addf %226, %227 : vector<8x128xf32>
    %229 = arith.truncf %228 : vector<8x128xf32> to vector<8x128xbf16>
    %230 = arith.index_cast %c5_i32 : i32 to index
    %c0_52 = arith.constant 0 : index
    %c0_53 = arith.constant 0 : index
    %231 = vector.load %arg5[%230, %c0_52, %c0_53] : memref<8x8x128xbf16, #tpu.memory_space<vmem>>, vector<1x8x128xbf16>
    %232 = vector.shape_cast %231 : vector<1x8x128xbf16> to vector<8x128xbf16>
    %233 = vector.shape_cast %229 : vector<8x128xbf16> to vector<1x8x128xbf16>
    tpu.vector_store %arg5[%230, %c0_52, %c0_53], %233 {strides = array<i32>} : memref<8x8x128xbf16, #tpu.memory_space<vmem>>, vector<1x8x128xbf16>,
    %c6_i32 = arith.constant 6 : i32
    %234 = arith.index_cast %c6_i32 : i32 to index
    %c0_54 = arith.constant 0 : index
    %c0_55 = arith.constant 0 : index
    %235 = vector.load %arg1[%234, %c0_54, %c0_55] : memref<8x8x384xf32, #tpu.memory_space<vmem>>, vector<1x8x384xf32>
    %236 = vector.shape_cast %235 : vector<1x8x384xf32> to vector<8x384xf32>
    %237 = arith.truncf %228 : vector<8x128xf32> to vector<8x128xbf16>
    %cst_56 = arith.constant dense<0.000000e+00> : vector<8x384xf32>
    %238 = tpu.matmul %237, %3, %cst_56 {dimension_numbers = #tpu.dot_dimension_numbers<[1], [0], [0], [1], [0, 0, 1, 1], [], []>} : vector<8x128xbf16>, vector<128x384xbf16>, vector<8x384xf32> -> vector<8x384xf32>
    %239 = vector.extract_strided_slice %236 {offsets = [0, 0], sizes = [8, 128], strides = [1, 1]} : vector<8x384xf32> to vector<8x128xf32>
    %240 = vector.extract_strided_slice %238 {offsets = [0, 0], sizes = [8, 128], strides = [1, 1]} : vector<8x384xf32> to vector<8x128xf32>
    %241 = arith.addf %239, %240 : vector<8x128xf32>
    %242 = arith.negf %241 : vector<8x128xf32>
    %243 = math.exp %242 : vector<8x128xf32>
    %cst_57 = arith.constant 1.000000e+00 : f32
    %244 = vector.broadcast %cst_57 : f32 to vector<8x128xf32>
    %245 = arith.addf %244, %243 : vector<8x128xf32>
    %246 = arith.divf %244, %245 : vector<8x128xf32>
    %247 = vector.extract_strided_slice %236 {offsets = [0, 128], sizes = [8, 128], strides = [1, 1]} : vector<8x384xf32> to vector<8x128xf32>
    %248 = vector.extract_strided_slice %238 {offsets = [0, 128], sizes = [8, 128], strides = [1, 1]} : vector<8x384xf32> to vector<8x128xf32>
    %249 = arith.addf %247, %248 : vector<8x128xf32>
    %250 = arith.negf %249 : vector<8x128xf32>
    %251 = math.exp %250 : vector<8x128xf32>
    %cst_58 = arith.constant 1.000000e+00 : f32
    %252 = vector.broadcast %cst_58 : f32 to vector<8x128xf32>
    %253 = arith.addf %252, %251 : vector<8x128xf32>
    %254 = arith.divf %252, %253 : vector<8x128xf32>
    %255 = vector.extract_strided_slice %236 {offsets = [0, 256], sizes = [8, 128], strides = [1, 1]} : vector<8x384xf32> to vector<8x128xf32>
    %256 = vector.extract_strided_slice %238 {offsets = [0, 256], sizes = [8, 128], strides = [1, 1]} : vector<8x384xf32> to vector<8x128xf32>
    %257 = vector.broadcast %4 : vector<1x128xf32> to vector<8x128xf32>
    %258 = arith.addf %256, %257 : vector<8x128xf32>
    %259 = arith.mulf %246, %258 : vector<8x128xf32>
    %260 = arith.addf %255, %259 : vector<8x128xf32>
    %261 = math.tanh %260 : vector<8x128xf32>
    %cst_59 = arith.constant 1.000000e+00 : f32
    %262 = vector.broadcast %cst_59 : f32 to vector<8x128xf32>
    %263 = arith.subf %262, %254 : vector<8x128xf32>
    %264 = arith.mulf %263, %261 : vector<8x128xf32>
    %265 = arith.mulf %254, %228 : vector<8x128xf32>
    %266 = arith.addf %264, %265 : vector<8x128xf32>
    %267 = arith.truncf %266 : vector<8x128xf32> to vector<8x128xbf16>
    %268 = arith.index_cast %c6_i32 : i32 to index
    %c0_60 = arith.constant 0 : index
    %c0_61 = arith.constant 0 : index
    %269 = vector.load %arg5[%268, %c0_60, %c0_61] : memref<8x8x128xbf16, #tpu.memory_space<vmem>>, vector<1x8x128xbf16>
    %270 = vector.shape_cast %269 : vector<1x8x128xbf16> to vector<8x128xbf16>
    %271 = vector.shape_cast %267 : vector<8x128xbf16> to vector<1x8x128xbf16>
    tpu.vector_store %arg5[%268, %c0_60, %c0_61], %271 {strides = array<i32>} : memref<8x8x128xbf16, #tpu.memory_space<vmem>>, vector<1x8x128xbf16>,
    %c7_i32 = arith.constant 7 : i32
    %272 = arith.index_cast %c7_i32 : i32 to index
    %c0_62 = arith.constant 0 : index
    %c0_63 = arith.constant 0 : index
    %273 = vector.load %arg1[%272, %c0_62, %c0_63] : memref<8x8x384xf32, #tpu.memory_space<vmem>>, vector<1x8x384xf32>
    %274 = vector.shape_cast %273 : vector<1x8x384xf32> to vector<8x384xf32>
    %275 = arith.truncf %266 : vector<8x128xf32> to vector<8x128xbf16>
    %cst_64 = arith.constant dense<0.000000e+00> : vector<8x384xf32>
    %276 = tpu.matmul %275, %3, %cst_64 {dimension_numbers = #tpu.dot_dimension_numbers<[1], [0], [0], [1], [0, 0, 1, 1], [], []>} : vector<8x128xbf16>, vector<128x384xbf16>, vector<8x384xf32> -> vector<8x384xf32>
    %277 = vector.extract_strided_slice %274 {offsets = [0, 0], sizes = [8, 128], strides = [1, 1]} : vector<8x384xf32> to vector<8x128xf32>
    %278 = vector.extract_strided_slice %276 {offsets = [0, 0], sizes = [8, 128], strides = [1, 1]} : vector<8x384xf32> to vector<8x128xf32>
    %279 = arith.addf %277, %278 : vector<8x128xf32>
    %280 = arith.negf %279 : vector<8x128xf32>
    %281 = math.exp %280 : vector<8x128xf32>
    %cst_65 = arith.constant 1.000000e+00 : f32
    %282 = vector.broadcast %cst_65 : f32 to vector<8x128xf32>
    %283 = arith.addf %282, %281 : vector<8x128xf32>
    %284 = arith.divf %282, %283 : vector<8x128xf32>
    %285 = vector.extract_strided_slice %274 {offsets = [0, 128], sizes = [8, 128], strides = [1, 1]} : vector<8x384xf32> to vector<8x128xf32>
    %286 = vector.extract_strided_slice %276 {offsets = [0, 128], sizes = [8, 128], strides = [1, 1]} : vector<8x384xf32> to vector<8x128xf32>
    %287 = arith.addf %285, %286 : vector<8x128xf32>
    %288 = arith.negf %287 : vector<8x128xf32>
    %289 = math.exp %288 : vector<8x128xf32>
    %cst_66 = arith.constant 1.000000e+00 : f32
    %290 = vector.broadcast %cst_66 : f32 to vector<8x128xf32>
    %291 = arith.addf %290, %289 : vector<8x128xf32>
    %292 = arith.divf %290, %291 : vector<8x128xf32>
    %293 = vector.extract_strided_slice %274 {offsets = [0, 256], sizes = [8, 128], strides = [1, 1]} : vector<8x384xf32> to vector<8x128xf32>
    %294 = vector.extract_strided_slice %276 {offsets = [0, 256], sizes = [8, 128], strides = [1, 1]} : vector<8x384xf32> to vector<8x128xf32>
    %295 = vector.broadcast %4 : vector<1x128xf32> to vector<8x128xf32>
    %296 = arith.addf %294, %295 : vector<8x128xf32>
    %297 = arith.mulf %284, %296 : vector<8x128xf32>
    %298 = arith.addf %293, %297 : vector<8x128xf32>
    %299 = math.tanh %298 : vector<8x128xf32>
    %cst_67 = arith.constant 1.000000e+00 : f32
    %300 = vector.broadcast %cst_67 : f32 to vector<8x128xf32>
    %301 = arith.subf %300, %292 : vector<8x128xf32>
    %302 = arith.mulf %301, %299 : vector<8x128xf32>
    %303 = arith.mulf %292, %266 : vector<8x128xf32>
    %304 = arith.addf %302, %303 : vector<8x128xf32>
    %305 = arith.truncf %304 : vector<8x128xf32> to vector<8x128xbf16>
    %306 = arith.index_cast %c7_i32 : i32 to index
    %c0_68 = arith.constant 0 : index
    %c0_69 = arith.constant 0 : index
    %307 = vector.load %arg5[%306, %c0_68, %c0_69] : memref<8x8x128xbf16, #tpu.memory_space<vmem>>, vector<1x8x128xbf16>
    %308 = vector.shape_cast %307 : vector<1x8x128xbf16> to vector<8x128xbf16>
    %309 = vector.shape_cast %305 : vector<8x128xbf16> to vector<1x8x128xbf16>
    tpu.vector_store %arg5[%306, %c0_68, %c0_69], %309 {strides = array<i32>} : memref<8x8x128xbf16, #tpu.memory_space<vmem>>, vector<1x8x128xbf16>,
    %c8_i32 = arith.constant 8 : i32
    %c0_70 = arith.constant 0 : index
    %c0_71 = arith.constant 0 : index
    %310 = vector.load %arg6[%c0_70, %c0_71] : memref<8x128xf32, #tpu.memory_space<vmem>>, vector<8x128xf32>
    tpu.vector_store %arg6[%c0_70, %c0_71], %304 {strides = array<i32>} : memref<8x128xf32, #tpu.memory_space<vmem>>, vector<8x128xf32>,
    return
  }
  func.func @transform_0(%arg0: i32) -> (i32, i32, i32) {
    %c0_i32 = arith.constant 0 : i32
    %c0_i32_0 = arith.constant 0 : i32
    %c0_i32_1 = arith.constant 0 : i32
    return %arg0, %c0_i32, %c0_i32_0 : i32, i32, i32
  }
  func.func @transform_1(%arg0: i32) -> (i32, i32) {
    %c0_i32 = arith.constant 0 : i32
    %c0_i32_0 = arith.constant 0 : i32
    %c0_i32_1 = arith.constant 0 : i32
    return %c0_i32, %c0_i32_0 : i32, i32
  }
  func.func @transform_2(%arg0: i32) -> (i32, i32) {
    %c0_i32 = arith.constant 0 : i32
    %c0_i32_0 = arith.constant 0 : i32
    %c0_i32_1 = arith.constant 0 : i32
    return %c0_i32, %c0_i32_0 : i32, i32
  }
  func.func @transform_3(%arg0: i32) -> (i32, i32) {
    %c0_i32 = arith.constant 0 : i32
    %c0_i32_0 = arith.constant 0 : i32
    %c0_i32_1 = arith.constant 0 : i32
    return %c0_i32, %c0_i32_0 : i32, i32
  }
  func.func @transform_4(%arg0: i32) -> (i32, i32, i32) {
    %c0_i32 = arith.constant 0 : i32
    %c0_i32_0 = arith.constant 0 : i32
    %c0_i32_1 = arith.constant 0 : i32
    return %arg0, %c0_i32, %c0_i32_0 : i32, i32, i32
  }
  func.func @transform_5(%arg0: i32) -> (i32, i32) {
    %c0_i32 = arith.constant 0 : i32
    %c0_i32_0 = arith.constant 0 : i32
    %c0_i32_1 = arith.constant 0 : i32
    return %c0_i32, %c0_i32_0 : i32, i32
  }
}

</mosaic_0001>

<llo_original>
// kernel: tpu_custom_call.1
$region0: #{tpu_custom_call.1}
  #allocation0 [shape = 'u32[]', space=smem, size = 0x4, offset = 0x4, fixed_abs, tag = 'smem constant byte address 0x4 - core index']
  #allocation1 [shape = 'u32[72,128]{1,0:T(1,128)}', space=vmem, size = 0x9000, scoped, tag = 'internal scratch']
  %s0 = inlined_call_operand.hbm [shape: f32[8,8,384], index: 0, kind: input, shape index: {}]
  %s1 = inlined_call_operand.hbm [shape: f32[8,128], index: 1, kind: input, shape index: {}]
  %s2 = inlined_call_operand.hbm [shape: bf16[128,384], index: 2, kind: input, shape index: {}]
  %s3 = inlined_call_operand.vmem [shape: f32[1,128], index: 3, kind: input, shape index: {}]
  %s4 = inlined_call_operand.hbm [shape: bf16[8,8,128], index: 4, kind: output, shape index: {0}]
  %s5 = inlined_call_operand.hbm [shape: f32[8,128], index: 5, kind: output, shape index: {1}]
  %6 = xla_tuple %s4, %s5
  %s7 = sld [smem:[#allocation0]]
  $region50: #{tpu_custom_call.1} parent=0
    _
  %s9 = ssub.s32 1, %s7
  %s10 = scalar_select 0, %s9, %s7
  $region1: #{tpu_custom_call.1} parent=0
    #allocation2 [shape = 'u8[98304]{0}', space=vmem, size = 0x18000, scoped, tag = 'input window, operand 0, single buffered']
    #allocation3 [shape = 's32[1]{0}', space=sflag, size = 0x4, scoped, tag = 'scoped memory for tpu_custom_call.1']
    #allocation4 [shape = 's32[1]{0}', space=sflag, size = 0x4, scoped, tag = 'scoped memory for tpu_custom_call.1']
    #allocation5 [shape = 'u8[4096]{0}', space=vmem, size = 0x1000, scoped, tag = 'input window, operand 1, single buffered']
    #allocation6 [shape = 's32[1]{0}', space=sflag, size = 0x4, scoped, tag = 'scoped memory for tpu_custom_call.1']
    #allocation7 [shape = 'u8[98304]{0}', space=vmem, size = 0x18000, scoped, tag = 'input window, operand 2, single buffered']
    #allocation8 [shape = 'u8[16384]{0}', space=vmem, size = 0x4000, scoped, tag = 'output window, operand 0, single buffered']
    #allocation9 [shape = 'u8[4096]{0}', space=vmem, size = 0x1000, scoped, tag = 'output window, operand 1, single buffered']
    #allocation10 [shape = 's32[1]{0}', space=sflag, size = 0x4, scoped, tag = 'scoped memory for tpu_custom_call.1']
    %11 = vsyncpa [#allocation3], 0
    %12 = vsyncpa [#allocation6], 0
    %13 = vsyncpa [#allocation4], 0
    %14 = vsyncpa [#allocation10], 0
    // Predicated region
    $region2: #{tpu_custom_call.1} parent=1 // pred_check
      _
    $region3: #{tpu_custom_call.1} parent=1 // pred_check_branch
      %16 = sbr.rel (0) target = $region5
    $region4: #{tpu_custom_call.1} parent=1 // pred_region
      %18 = vsyncadd [#allocation3], 0
      %s19 = sshll.u32 %s0, 4
      %s20 = int_to_ptr.hbm [resolvable:$true] %s19
      %s21 = sshll.u32 [#allocation2], 4
      %s22 = int_to_ptr.vmem [resolvable:$true] %s21
      %27 = dma.hbm_to_vmem [thread:$0]  %s20, 3072, %s22, [#allocation3], 384, 384, 24
    $region5: #{tpu_custom_call.1} parent=1 // pred_fallthru
      _
    // Predicated region
    $region6: #{tpu_custom_call.1} parent=1 // pred_check
      _
    $region7: #{tpu_custom_call.1} parent=1 // pred_check_branch
      %29 = sbr.rel (0) target = $region9
    $region8: #{tpu_custom_call.1} parent=1 // pred_region
      %31 = vsyncadd [#allocation6], 0
      %s33 = sshll.u32 %s1, 4
      %s34 = int_to_ptr.hbm [resolvable:$true] %s33
      %s35 = sshll.u32 [#allocation5], 4
      %s36 = int_to_ptr.vmem [resolvable:$true] %s35
      %38 = dma.hbm_to_vmem [thread:$0]  %s34, 128, %s36, [#allocation6]
    $region9: #{tpu_custom_call.1} parent=1 // pred_fallthru
      _
    // Predicated region
    $region10: #{tpu_custom_call.1} parent=1 // pred_check
      _
    $region11: #{tpu_custom_call.1} parent=1 // pred_check_branch
      %40 = sbr.rel (0) target = $region13
    $region12: #{tpu_custom_call.1} parent=1 // pred_region
      %42 = vsyncadd [#allocation6], 0
      %s43 = sshll.u32 %s2, 4
      %s44 = int_to_ptr.hbm [resolvable:$true] %s43
      %s45 = sshll.u32 [#allocation7], 4
      %s46 = int_to_ptr.vmem [resolvable:$true] %s45
      %51 = dma.hbm_to_vmem [thread:$0]  %s44, 3072, %s46, [#allocation6], 192, 192, 12
    $region13: #{tpu_custom_call.1} parent=1 // pred_fallthru
      _
    // Predicated region
    $region14: #{tpu_custom_call.1} parent=1 // pred_check
      _
    $region15: #{tpu_custom_call.1} parent=1 // pred_check_branch
      %53 = sbr.rel (0) target = $region17
    $region16: #{tpu_custom_call.1} parent=1 // pred_region
      _
    $region17: #{tpu_custom_call.1} parent=1 // pred_fallthru
      _
    // Predicated region
    $region18: #{tpu_custom_call.1} parent=1 // pred_check
      _
    $region19: #{tpu_custom_call.1} parent=1 // pred_check_branch
      %55 = sbr.rel (0) target = $region21
    $region20: #{tpu_custom_call.1} parent=1 // pred_region
      %57 = dma.done [#allocation3], 3072
    $region21: #{tpu_custom_call.1} parent=1 // pred_fallthru
      _
    // Predicated region
    $region22: #{tpu_custom_call.1} parent=1 // pred_check
      _
    $region23: #{tpu_custom_call.1} parent=1 // pred_check_branch
      %59 = sbr.rel (0) target = $region25
    $region24: #{tpu_custom_call.1} parent=1 // pred_region
      %61 = dma.done [#allocation6], 128
    $region25: #{tpu_custom_call.1} parent=1 // pred_fallthru
      _
    // Predicated region
    $region26: #{tpu_custom_call.1} parent=1 // pred_check
      _
    $region27: #{tpu_custom_call.1} parent=1 // pred_check_branch
      %63 = sbr.rel (0) target = $region29
    $region28: #{tpu_custom_call.1} parent=1 // pred_region
      %65 = dma.done [#allocation6], 3072
    $region29: #{tpu_custom_call.1} parent=1 // pred_fallthru
      _
    %p66 = scmp.eq.s32.totalorder 0, 0
    // Predicated region
    $region30: #{tpu_custom_call.1} parent=1 // pred_check
      %p67 = pneg %p66
    $region31: #{tpu_custom_call.1} parent=1 // pred_check_branch
      %69 = sbr.rel (%p67) target = $region33
    $region32: #{tpu_custom_call.1} parent=1 // pred_region
      %v70 = vld [vmem:[#allocation5] sm:$0xff]
      %71 = vst [vmem:[#allocation9] sm:$0xff] %v70
    $region33: #{tpu_custom_call.1} parent=1 // pred_fallthru
      _
    %v72 = vld [vmem:[#allocation7] sm:$0xff]
    %v73 = vld [vmem:[#allocation7 + $0x8] sm:$0xf]
    %v74 = vld [vmem:[#allocation7 + $0xc] sm:$0xff]
    %v75 = vld [vmem:[#allocation7 + $0x14] sm:$0xf]
    %v76 = vld [vmem:[#allocation7 + $0x18] sm:$0xff]
    %v77 = vld [vmem:[#allocation7 + $0x20] sm:$0xf]
    %v78 = vld [vmem:[#allocation7 + $0x24] sm:$0xff]
    %v79 = vld [vmem:[#allocation7 + $0x2c] sm:$0xf]
    %v80 = vld [vmem:[#allocation7 + $0x30] sm:$0xff]
    %v81 = vld [vmem:[#allocation7 + $0x38] sm:$0xf]
    %v82 = vld [vmem:[#allocation7 + $0x3c] sm:$0xff]
    %v83 = vld [vmem:[#allocation7 + $0x44] sm:$0xf]
    %v84 = vld [vmem:[#allocation7 + $0x48] sm:$0xff]
    %v85 = vld [vmem:[#allocation7 + $0x50] sm:$0xf]
    %v86 = vld [vmem:[#allocation7 + $0x54] sm:$0xff]
    %v87 = vld [vmem:[#allocation7 + $0x5c] sm:$0xf]
    %v88 = vld [vmem:[#allocation7 + $0x60] sm:$0xff]
    %v89 = vld [vmem:[#allocation7 + $0x68] sm:$0xf]
    %v90 = vld [vmem:[#allocation7 + $0x6c] sm:$0xff]
    %v91 = vld [vmem:[#allocation7 + $0x74] sm:$0xf]
    %v92 = vld [vmem:[#allocation7 + $0x78] sm:$0xff]
    %v93 = vld [vmem:[#allocation7 + $0x80] sm:$0xf]
    %v94 = vld [vmem:[#allocation7 + $0x84] sm:$0xff]
    %v95 = vld [vmem:[#allocation7 + $0x8c] sm:$0xf]
    %v96 = vld [vmem:[#allocation7 + $0x90] sm:$0xff]
    %v97 = vld [vmem:[#allocation7 + $0x98] sm:$0xf]
    %v98 = vld [vmem:[#allocation7 + $0x9c] sm:$0xff]
    %v99 = vld [vmem:[#allocation7 + $0xa4] sm:$0xf]
    %v100 = vld [vmem:[#allocation7 + $0xa8] sm:$0xff]
    %v101 = vld [vmem:[#allocation7 + $0xb0] sm:$0xf]
    %v102 = vld [vmem:[#allocation7 + $0xb4] sm:$0xff]
    %v103 = vld [vmem:[#allocation7 + $0xbc] sm:$0xf]
    %v104 = vld [vmem:[%s3] sm:$0x1]
    %v105 = vld [vmem:[#allocation9] sm:$0xff]
    %v106 = vld [vmem:[#allocation2] sm:$0xff]
    %v107 = vld [vmem:[#allocation2 + $0x8] sm:$0xff]
    %v108 = vld [vmem:[#allocation2 + $0x10] sm:$0xff]
    %v109 = vpack.c.bf16 %v105, %v105
    %v142 = vunpack.c.l.b16 %v72
    %v143 = vunpack.c.h.b16 %v72
    %v144 = vunpack.c.l.b16 %v73
    %v145 = vunpack.c.l.b16 %v74
    %v146 = vunpack.c.h.b16 %v74
    %v147 = vunpack.c.l.b16 %v75
    %v148 = vunpack.c.l.b16 %v76
    %v149 = vunpack.c.h.b16 %v76
    %v150 = vunpack.c.l.b16 %v77
    %v151 = vunpack.c.l.b16 %v78
    %v152 = vunpack.c.h.b16 %v78
    %v153 = vunpack.c.l.b16 %v79
    %v154 = vunpack.c.l.b16 %v80
    %v155 = vunpack.c.h.b16 %v80
    %v156 = vunpack.c.l.b16 %v81
    %v157 = vunpack.c.l.b16 %v82
    %v158 = vunpack.c.h.b16 %v82
    %v159 = vunpack.c.l.b16 %v83
    %v160 = vunpack.c.l.b16 %v84
    %v161 = vunpack.c.h.b16 %v84
    %v162 = vunpack.c.l.b16 %v85
    %v163 = vunpack.c.l.b16 %v86
    %v164 = vunpack.c.h.b16 %v86
    %v165 = vunpack.c.l.b16 %v87
    %v166 = vunpack.c.l.b16 %v88
    %v167 = vunpack.c.h.b16 %v88
    %v168 = vunpack.c.l.b16 %v89
    %v169 = vunpack.c.l.b16 %v90
    %v170 = vunpack.c.h.b16 %v90
    %v171 = vunpack.c.l.b16 %v91
    %v172 = vunpack.c.l.b16 %v92
    %v173 = vunpack.c.h.b16 %v92
    %v174 = vunpack.c.l.b16 %v93
    %v175 = vunpack.c.l.b16 %v94
    %v176 = vunpack.c.h.b16 %v94
    %v177 = vunpack.c.l.b16 %v95
    %v178 = vunpack.c.l.b16 %v96
    %v179 = vunpack.c.h.b16 %v96
    %v180 = vunpack.c.l.b16 %v97
    %v181 = vunpack.c.l.b16 %v98
    %v182 = vunpack.c.h.b16 %v98
    %v183 = vunpack.c.l.b16 %v99
    %v184 = vunpack.c.l.b16 %v100
    %v185 = vunpack.c.h.b16 %v100
    %v186 = vunpack.c.l.b16 %v101
    %v187 = vunpack.c.l.b16 %v102
    %v188 = vunpack.c.h.b16 %v102
    %v189 = vunpack.c.l.b16 %v103
    %v190 = vpack.c.b16 %v145, %v142
    %v191 = vpack.c.b16 %v146, %v143
    %v192 = vpack.c.b16 %v147, %v144
    %v193 = vpack.c.b16 %v151, %v148
    %v194 = vpack.c.b16 %v152, %v149
    %v195 = vpack.c.b16 %v153, %v150
    %v196 = vpack.c.b16 %v157, %v154
    %v197 = vpack.c.b16 %v158, %v155
    %v198 = vpack.c.b16 %v159, %v156
    %v199 = vpack.c.b16 %v163, %v160
    %v200 = vpack.c.b16 %v164, %v161
    %v201 = vpack.c.b16 %v165, %v162
    %v202 = vpack.c.b16 %v169, %v166
    %v203 = vpack.c.b16 %v170, %v167
    %v204 = vpack.c.b16 %v171, %v168
    %v205 = vpack.c.b16 %v175, %v172
    %v206 = vpack.c.b16 %v176, %v173
    %v207 = vpack.c.b16 %v177, %v174
    %v208 = vpack.c.b16 %v181, %v178
    %v209 = vpack.c.b16 %v182, %v179
    %v210 = vpack.c.b16 %v183, %v180
    %v211 = vpack.c.b16 %v187, %v184
    %v212 = vpack.c.b16 %v188, %v185
    %v213 = vpack.c.b16 %v189, %v186
    %238 = vmatpush.bf16.msra.mxu0 %v211
    %239 = vmatpush.bf16.msra.mxu0 %v208
    %240 = vmatpush.bf16.msra.mxu0 %v205
    %241 = vmatpush.bf16.msra.mxu0 %v202
    %242 = vmatpush.bf16.msra.mxu0 %v199
    %243 = vmatpush.bf16.msra.mxu0 %v196
    %244 = vmatpush.bf16.msra.mxu0 %v193
    %245 = vmatpush.bf16.msra.mxu0 %v190
    %246 = vmatmul.bf16.gmra.mxu0 %v109
    %v247 = vpop.f32.mrf.mxu0
    %v248 = vadd.f32 0.0, %v247
    %v249 = vpop.f32.mrf.mxu0
    %250 = vdwg.mxu0
    %251 = vmatpush.bf16.msra.mxu0 %v212
    %252 = vmatpush.bf16.msra.mxu0 %v209
    %253 = vmatpush.bf16.msra.mxu0 %v206
    %254 = vmatpush.bf16.msra.mxu0 %v203
    %255 = vmatpush.bf16.msra.mxu0 %v200
    %256 = vmatpush.bf16.msra.mxu0 %v197
    %257 = vmatpush.bf16.msra.mxu0 %v194
    %258 = vmatpush.bf16.msra.mxu0 %v191
    %259 = vmatmul.bf16.gmra.mxu0 %v109
    %v260 = vpop.f32.mrf.mxu0
    %v261 = vadd.f32 0.0, %v260
    %v262 = vpop.f32.mrf.mxu0
    %263 = vdwg.mxu0
    %264 = vmatpush.bf16.msra.mxu0 %v213
    %265 = vmatpush.bf16.msra.mxu0 %v210
    %266 = vmatpush.bf16.msra.mxu0 %v207
    %267 = vmatpush.bf16.msra.mxu0 %v204
    %268 = vmatpush.bf16.msra.mxu0 %v201
    %269 = vmatpush.bf16.msra.mxu0 %v198
    %270 = vmatpush.bf16.msra.mxu0 %v195
    %271 = vmatpush.bf16.msra.mxu0 %v192
    %272 = vmatmul.bf16.gmra.mxu0 %v109
    %v273 = vpop.f32.mrf.mxu0
    %v274 = vadd.f32 0.0, %v273
    %v275 = vpop.f32.mrf.mxu0
    %276 = vdwg.mxu0
    %v277 = vadd.f32 %v106, %v248
    %v278 = vxor.u32 %v277, 2147483648
    %v279 = vmul.f32 %v278, 1.442695
    %v280 = vpow.pop %v279
    %v281 = vadd.f32 %v280, 1.0
    %v282 = vrcp.pop %v281
    %v283 = vmul.f32 %v281, %v282
    %v284 = vsub.f32 1.0, %v283
    %v285 = vmul.f32 %v282, %v284
    %v286 = vadd.f32 %v282, %v285
    %vm287 = vweird.f32 %v281
    %vm288 = vweird.f32 %v282
    %vm289 = vmor %vm287, %vm288
    %v290 = vsel %vm289, %v282, %v286
    %v291 = vand.u32 2147483647, %v281
    %vm292 = vcmp.eq.f32.partialorder %v291, 8.507059e+37
    %v293 = vand.u32 %v281, 2147483648
    %v294 = vor.u32 1.1754944e-38, %v293
    %v295 = vsel %vm292, %v294, %v290
    %v296 = vmul.f32 1.0, %v295
    %v297 = vadd.f32 %v107, %v261
    %v298 = vxor.u32 %v297, 2147483648
    %v299 = vmul.f32 %v298, 1.442695
    %v300 = vpow.pop %v299
    %v301 = vadd.f32 %v300, 1.0
    %v302 = vrcp.pop %v301
    %v303 = vmul.f32 %v301, %v302
    %v304 = vsub.f32 1.0, %v303
    %v305 = vmul.f32 %v302, %v304
    %v306 = vadd.f32 %v302, %v305
    %vm307 = vweird.f32 %v301
    %vm308 = vweird.f32 %v302
    %vm309 = vmor %vm307, %vm308
    %v310 = vsel %vm309, %v302, %v306
    %v311 = vand.u32 2147483647, %v301
    %vm312 = vcmp.eq.f32.partialorder %v311, 8.507059e+37
    %v313 = vand.u32 %v301, 2147483648
    %v314 = vor.u32 1.1754944e-38, %v313
    %v315 = vsel %vm312, %v314, %v310
    %v316 = vmul.f32 1.0, %v315
    %v318 = vperm.slane %v104, 0
    %v320 = vadd.f32 %v274, %v318
    %v321 = vmul.f32 %v296, %v320
    %v322 = vadd.f32 %v108, %v321
    %v323 = vtanh.pop %v322
    %v324 = vsub.f32 1.0, %v316
    %v325 = vmul.f32 %v324, %v323
    %v326 = vmul.f32 %v316, %v105
    %v327 = vadd.f32 %v325, %v326
    %v328 = vpack.c.bf16 %v327, %v327
    %329 = vst [vmem:[#allocation8] sm:$0xf] %v328
    %s330 = scalar_lea.vmem [#allocation2], 24
    %v331 = vld [vmem:[%s330] sm:$0xff]
    %v332 = vld [vmem:[%s330 + $0x8] sm:$0xff]
    %v333 = vld [vmem:[%s330 + $0x10] sm:$0xff]
    %334 = vmatpush.bf16.msra.mxu0 %v211
    %335 = vmatpush.bf16.msra.mxu0 %v208
    %336 = vmatpush.bf16.msra.mxu0 %v205
    %337 = vmatpush.bf16.msra.mxu0 %v202
    %338 = vmatpush.bf16.msra.mxu0 %v199
    %339 = vmatpush.bf16.msra.mxu0 %v196
    %340 = vmatpush.bf16.msra.mxu0 %v193
    %341 = vmatpush.bf16.msra.mxu0 %v190
    %342 = vmatmul.bf16.gmra.mxu0 %v328
    %v343 = vpop.f32.mrf.mxu0
    %v344 = vadd.f32 0.0, %v343
    %v345 = vpop.f32.mrf.mxu0
    %346 = vdwg.mxu0
    %347 = vmatpush.bf16.msra.mxu0 %v212
    %348 = vmatpush.bf16.msra.mxu0 %v209
    %349 = vmatpush.bf16.msra.mxu0 %v206
    %350 = vmatpush.bf16.msra.mxu0 %v203
    %351 = vmatpush.bf16.msra.mxu0 %v200
    %352 = vmatpush.bf16.msra.mxu0 %v197
    %353 = vmatpush.bf16.msra.mxu0 %v194
    %354 = vmatpush.bf16.msra.mxu0 %v191
    %355 = vmatmul.bf16.gmra.mxu0 %v328
    %v356 = vpop.f32.mrf.mxu0
    %v357 = vadd.f32 0.0, %v356
    %v358 = vpop.f32.mrf.mxu0
    %359 = vdwg.mxu0
    %360 = vmatpush.bf16.msra.mxu0 %v213
    %361 = vmatpush.bf16.msra.mxu0 %v210
    %362 = vmatpush.bf16.msra.mxu0 %v207
    %363 = vmatpush.bf16.msra.mxu0 %v204
    %364 = vmatpush.bf16.msra.mxu0 %v201
    %365 = vmatpush.bf16.msra.mxu0 %v198
    %366 = vmatpush.bf16.msra.mxu0 %v195
    %367 = vmatpush.bf16.msra.mxu0 %v192
    %368 = vmatmul.bf16.gmra.mxu0 %v328
    %v369 = vpop.f32.mrf.mxu0
    %v370 = vadd.f32 0.0, %v369
    %v371 = vpop.f32.mrf.mxu0
    %372 = vdwg.mxu0
    %v373 = vadd.f32 %v331, %v344
    %v374 = vxor.u32 %v373, 2147483648
    %v375 = vmul.f32 %v374, 1.442695
    %v376 = vpow.pop %v375
    %v377 = vadd.f32 %v376, 1.0
    %v378 = vrcp.pop %v377
    %v379 = vmul.f32 %v377, %v378
    %v380 = vsub.f32 1.0, %v379
    %v381 = vmul.f32 %v378, %v380
    %v382 = vadd.f32 %v378, %v381
    %vm383 = vweird.f32 %v377
    %vm384 = vweird.f32 %v378
    %vm385 = vmor %vm383, %vm384
    %v386 = vsel %vm385, %v378, %v382
    %v387 = vand.u32 2147483647, %v377
    %vm388 = vcmp.eq.f32.partialorder %v387, 8.507059e+37
    %v389 = vand.u32 %v377, 2147483648
    %v390 = vor.u32 1.1754944e-38, %v389
    %v391 = vsel %vm388, %v390, %v386
    %v392 = vmul.f32 1.0, %v391
    %v393 = vadd.f32 %v332, %v357
    %v394 = vxor.u32 %v393, 2147483648
    %v395 = vmul.f32 %v394, 1.442695
    %v396 = vpow.pop %v395
    %v397 = vadd.f32 %v396, 1.0
    %v398 = vrcp.pop %v397
    %v399 = vmul.f32 %v397, %v398
    %v400 = vsub.f32 1.0, %v399
    %v401 = vmul.f32 %v398, %v400
    %v402 = vadd.f32 %v398, %v401
    %vm403 = vweird.f32 %v397
    %vm404 = vweird.f32 %v398
    %vm405 = vmor %vm403, %vm404
    %v406 = vsel %vm405, %v398, %v402
    %v407 = vand.u32 2147483647, %v397
    %vm408 = vcmp.eq.f32.partialorder %v407, 8.507059e+37
    %v409 = vand.u32 %v397, 2147483648
    %v410 = vor.u32 1.1754944e-38, %v409
    %v411 = vsel %vm408, %v410, %v406
    %v412 = vmul.f32 1.0, %v411
    %v413 = vadd.f32 %v370, %v318
    %v414 = vmul.f32 %v392, %v413
    %v415 = vadd.f32 %v333, %v414
    %v416 = vtanh.pop %v415
    %v417 = vsub.f32 1.0, %v412
    %v418 = vmul.f32 %v417, %v416
    %v419 = vmul.f32 %v412, %v327
    %v420 = vadd.f32 %v418, %v419
    %v421 = vpack.c.bf16 %v420, %v420
    %s422 = scalar_lea.vmem [#allocation8], 4
    %423 = vst [vmem:[%s422] sm:$0xf] %v421
    %s424 = scalar_lea.vmem [#allocation2], 48
    %v425 = vld [vmem:[%s424] sm:$0xff]
    %v426 = vld [vmem:[%s424 + $0x8] sm:$0xff]
    %v427 = vld [vmem:[%s424 + $0x10] sm:$0xff]
    %428 = vmatpush.bf16.msra.mxu0 %v211
    %429 = vmatpush.bf16.msra.mxu0 %v208
    %430 = vmatpush.bf16.msra.mxu0 %v205
    %431 = vmatpush.bf16.msra.mxu0 %v202
    %432 = vmatpush.bf16.msra.mxu0 %v199
    %433 = vmatpush.bf16.msra.mxu0 %v196
    %434 = vmatpush.bf16.msra.mxu0 %v193
    %435 = vmatpush.bf16.msra.mxu0 %v190
    %436 = vmatmul.bf16.gmra.mxu0 %v421
    %v437 = vpop.f32.mrf.mxu0
    %v438 = vadd.f32 0.0, %v437
    %v439 = vpop.f32.mrf.mxu0
    %440 = vdwg.mxu0
    %441 = vmatpush.bf16.msra.mxu0 %v212
    %442 = vmatpush.bf16.msra.mxu0 %v209
    %443 = vmatpush.bf16.msra.mxu0 %v206
    %444 = vmatpush.bf16.msra.mxu0 %v203
    %445 = vmatpush.bf16.msra.mxu0 %v200
    %446 = vmatpush.bf16.msra.mxu0 %v197
    %447 = vmatpush.bf16.msra.mxu0 %v194
    %448 = vmatpush.bf16.msra.mxu0 %v191
    %449 = vmatmul.bf16.gmra.mxu0 %v421
    %v450 = vpop.f32.mrf.mxu0
    %v451 = vadd.f32 0.0, %v450
    %v452 = vpop.f32.mrf.mxu0
    %453 = vdwg.mxu0
    %454 = vmatpush.bf16.msra.mxu0 %v213
    %455 = vmatpush.bf16.msra.mxu0 %v210
    %456 = vmatpush.bf16.msra.mxu0 %v207
    %457 = vmatpush.bf16.msra.mxu0 %v204
    %458 = vmatpush.bf16.msra.mxu0 %v201
    %459 = vmatpush.bf16.msra.mxu0 %v198
    %460 = vmatpush.bf16.msra.mxu0 %v195
    %461 = vmatpush.bf16.msra.mxu0 %v192
    %462 = vmatmul.bf16.gmra.mxu0 %v421
    %v463 = vpop.f32.mrf.mxu0
    %v464 = vadd.f32 0.0, %v463
    %v465 = vpop.f32.mrf.mxu0
    %466 = vdwg.mxu0
    %v467 = vadd.f32 %v425, %v438
    %v468 = vxor.u32 %v467, 2147483648
    %v469 = vmul.f32 %v468, 1.442695
    %v470 = vpow.pop %v469
    %v471 = vadd.f32 %v470, 1.0
    %v472 = vrcp.pop %v471
    %v473 = vmul.f32 %v471, %v472
    %v474 = vsub.f32 1.0, %v473
    %v475 = vmul.f32 %v472, %v474
    %v476 = vadd.f32 %v472, %v475
    %vm477 = vweird.f32 %v471
    %vm478 = vweird.f32 %v472
    %vm479 = vmor %vm477, %vm478
    %v480 = vsel %vm479, %v472, %v476
    %v481 = vand.u32 2147483647, %v471
    %vm482 = vcmp.eq.f32.partialorder %v481, 8.507059e+37
    %v483 = vand.u32 %v471, 2147483648
    %v484 = vor.u32 1.1754944e-38, %v483
    %v485 = vsel %vm482, %v484, %v480
    %v486 = vmul.f32 1.0, %v485
    %v487 = vadd.f32 %v426, %v451
    %v488 = vxor.u32 %v487, 2147483648
    %v489 = vmul.f32 %v488, 1.442695
    %v490 = vpow.pop %v489
    %v491 = vadd.f32 %v490, 1.0
    %v492 = vrcp.pop %v491
    %v493 = vmul.f32 %v491, %v492
    %v494 = vsub.f32 1.0, %v493
    %v495 = vmul.f32 %v492, %v494
    %v496 = vadd.f32 %v492, %v495
    %vm497 = vweird.f32 %v491
    %vm498 = vweird.f32 %v492
    %vm499 = vmor %vm497, %vm498
    %v500 = vsel %vm499, %v492, %v496
    %v501 = vand.u32 2147483647, %v491
    %vm502 = vcmp.eq.f32.partialorder %v501, 8.507059e+37
    %v503 = vand.u32 %v491, 2147483648
    %v504 = vor.u32 1.1754944e-38, %v503
    %v505 = vsel %vm502, %v504, %v500
    %v506 = vmul.f32 1.0, %v505
    %v507 = vadd.f32 %v464, %v318
    %v508 = vmul.f32 %v486, %v507
    %v509 = vadd.f32 %v427, %v508
    %v510 = vtanh.pop %v509
    %v511 = vsub.f32 1.0, %v506
    %v512 = vmul.f32 %v511, %v510
    %v513 = vmul.f32 %v506, %v420
    %v514 = vadd.f32 %v512, %v513
    %v515 = vpack.c.bf16 %v514, %v514
    %s516 = scalar_lea.vmem [#allocation8], 8
    %517 = vst [vmem:[%s516] sm:$0xf] %v515
    %s518 = scalar_lea.vmem [#allocation2], 72
    %v519 = vld [vmem:[%s518] sm:$0xff]
    %v520 = vld [vmem:[%s518 + $0x8] sm:$0xff]
    %v521 = vld [vmem:[%s518 + $0x10] sm:$0xff]
    %522 = vmatpush.bf16.msra.mxu0 %v211
    %523 = vmatpush.bf16.msra.mxu0 %v208
    %524 = vmatpush.bf16.msra.mxu0 %v205
    %525 = vmatpush.bf16.msra.mxu0 %v202
    %526 = vmatpush.bf16.msra.mxu0 %v199
    %527 = vmatpush.bf16.msra.mxu0 %v196
    %528 = vmatpush.bf16.msra.mxu0 %v193
    %529 = vmatpush.bf16.msra.mxu0 %v190
    %530 = vmatmul.bf16.gmra.mxu0 %v515
    %v531 = vpop.f32.mrf.mxu0
    %v532 = vadd.f32 0.0, %v531
    %v533 = vpop.f32.mrf.mxu0
    %534 = vdwg.mxu0
    %535 = vmatpush.bf16.msra.mxu0 %v212
    %536 = vmatpush.bf16.msra.mxu0 %v209
    %537 = vmatpush.bf16.msra.mxu0 %v206
    %538 = vmatpush.bf16.msra.mxu0 %v203
    %539 = vmatpush.bf16.msra.mxu0 %v200
    %540 = vmatpush.bf16.msra.mxu0 %v197
    %541 = vmatpush.bf16.msra.mxu0 %v194
    %542 = vmatpush.bf16.msra.mxu0 %v191
    %543 = vmatmul.bf16.gmra.mxu0 %v515
    %v544 = vpop.f32.mrf.mxu0
    %v545 = vadd.f32 0.0, %v544
    %v546 = vpop.f32.mrf.mxu0
    %547 = vdwg.mxu0
    %548 = vmatpush.bf16.msra.mxu0 %v213
    %549 = vmatpush.bf16.msra.mxu0 %v210
    %550 = vmatpush.bf16.msra.mxu0 %v207
    %551 = vmatpush.bf16.msra.mxu0 %v204
    %552 = vmatpush.bf16.msra.mxu0 %v201
    %553 = vmatpush.bf16.msra.mxu0 %v198
    %554 = vmatpush.bf16.msra.mxu0 %v195
    %555 = vmatpush.bf16.msra.mxu0 %v192
    %556 = vmatmul.bf16.gmra.mxu0 %v515
    %v557 = vpop.f32.mrf.mxu0
    %v558 = vadd.f32 0.0, %v557
    %v559 = vpop.f32.mrf.mxu0
    %560 = vdwg.mxu0
    %v561 = vadd.f32 %v519, %v532
    %v562 = vxor.u32 %v561, 2147483648
    %v563 = vmul.f32 %v562, 1.442695
    %v564 = vpow.pop %v563
    %v565 = vadd.f32 %v564, 1.0
    %v566 = vrcp.pop %v565
    %v567 = vmul.f32 %v565, %v566
    %v568 = vsub.f32 1.0, %v567
    %v569 = vmul.f32 %v566, %v568
    %v570 = vadd.f32 %v566, %v569
    %vm571 = vweird.f32 %v565
    %vm572 = vweird.f32 %v566
    %vm573 = vmor %vm571, %vm572
    %v574 = vsel %vm573, %v566, %v570
    %v575 = vand.u32 2147483647, %v565
    %vm576 = vcmp.eq.f32.partialorder %v575, 8.507059e+37
    %v577 = vand.u32 %v565, 2147483648
    %v578 = vor.u32 1.1754944e-38, %v577
    %v579 = vsel %vm576, %v578, %v574
    %v580 = vmul.f32 1.0, %v579
    %v581 = vadd.f32 %v520, %v545
    %v582 = vxor.u32 %v581, 2147483648
    %v583 = vmul.f32 %v582, 1.442695
    %v584 = vpow.pop %v583
    %v585 = vadd.f32 %v584, 1.0
    %v586 = vrcp.pop %v585
    %v587 = vmul.f32 %v585, %v586
    %v588 = vsub.f32 1.0, %v587
    %v589 = vmul.f32 %v586, %v588
    %v590 = vadd.f32 %v586, %v589
    %vm591 = vweird.f32 %v585
    %vm592 = vweird.f32 %v586
    %vm593 = vmor %vm591, %vm592
    %v594 = vsel %vm593, %v586, %v590
    %v595 = vand.u32 2147483647, %v585
    %vm596 = vcmp.eq.f32.partialorder %v595, 8.507059e+37
    %v597 = vand.u32 %v585, 2147483648
    %v598 = vor.u32 1.1754944e-38, %v597
    %v599 = vsel %vm596, %v598, %v594
    %v600 = vmul.f32 1.0, %v599
    %v601 = vadd.f32 %v558, %v318
    %v602 = vmul.f32 %v580, %v601
    %v603 = vadd.f32 %v521, %v602
    %v604 = vtanh.pop %v603
    %v605 = vsub.f32 1.0, %v600
    %v606 = vmul.f32 %v605, %v604
    %v607 = vmul.f32 %v600, %v514
    %v608 = vadd.f32 %v606, %v607
    %v609 = vpack.c.bf16 %v608, %v608
    %s610 = scalar_lea.vmem [#allocation8], 12
    %611 = vst [vmem:[%s610] sm:$0xf] %v609
    %s612 = scalar_lea.vmem [#allocation2], 96
    %v613 = vld [vmem:[%s612] sm:$0xff]
    %v614 = vld [vmem:[%s612 + $0x8] sm:$0xff]
    %v615 = vld [vmem:[%s612 + $0x10] sm:$0xff]
    %616 = vmatpush.bf16.msra.mxu0 %v211
    %617 = vmatpush.bf16.msra.mxu0 %v208
    %618 = vmatpush.bf16.msra.mxu0 %v205
    %619 = vmatpush.bf16.msra.mxu0 %v202
    %620 = vmatpush.bf16.msra.mxu0 %v199
    %621 = vmatpush.bf16.msra.mxu0 %v196
    %622 = vmatpush.bf16.msra.mxu0 %v193
    %623 = vmatpush.bf16.msra.mxu0 %v190
    %624 = vmatmul.bf16.gmra.mxu0 %v609
    %v625 = vpop.f32.mrf.mxu0
    %v626 = vadd.f32 0.0, %v625
    %v627 = vpop.f32.mrf.mxu0
    %628 = vdwg.mxu0
    %629 = vmatpush.bf16.msra.mxu0 %v212
    %630 = vmatpush.bf16.msra.mxu0 %v209
    %631 = vmatpush.bf16.msra.mxu0 %v206
    %632 = vmatpush.bf16.msra.mxu0 %v203
    %633 = vmatpush.bf16.msra.mxu0 %v200
    %634 = vmatpush.bf16.msra.mxu0 %v197
    %635 = vmatpush.bf16.msra.mxu0 %v194
    %636 = vmatpush.bf16.msra.mxu0 %v191
    %637 = vmatmul.bf16.gmra.mxu0 %v609
    %v638 = vpop.f32.mrf.mxu0
    %v639 = vadd.f32 0.0, %v638
    %v640 = vpop.f32.mrf.mxu0
    %641 = vdwg.mxu0
    %642 = vmatpush.bf16.msra.mxu0 %v213
    %643 = vmatpush.bf16.msra.mxu0 %v210
    %644 = vmatpush.bf16.msra.mxu0 %v207
    %645 = vmatpush.bf16.msra.mxu0 %v204
    %646 = vmatpush.bf16.msra.mxu0 %v201
    %647 = vmatpush.bf16.msra.mxu0 %v198
    %648 = vmatpush.bf16.msra.mxu0 %v195
    %649 = vmatpush.bf16.msra.mxu0 %v192
    %650 = vmatmul.bf16.gmra.mxu0 %v609
    %v651 = vpop.f32.mrf.mxu0
    %v652 = vadd.f32 0.0, %v651
    %v653 = vpop.f32.mrf.mxu0
    %654 = vdwg.mxu0
    %v655 = vadd.f32 %v613, %v626
    %v656 = vxor.u32 %v655, 2147483648
    %v657 = vmul.f32 %v656, 1.442695
    %v658 = vpow.pop %v657
    %v659 = vadd.f32 %v658, 1.0
    %v660 = vrcp.pop %v659
    %v661 = vmul.f32 %v659, %v660
    %v662 = vsub.f32 1.0, %v661
    %v663 = vmul.f32 %v660, %v662
    %v664 = vadd.f32 %v660, %v663
    %vm665 = vweird.f32 %v659
    %vm666 = vweird.f32 %v660
    %vm667 = vmor %vm665, %vm666
    %v668 = vsel %vm667, %v660, %v664
    %v669 = vand.u32 2147483647, %v659
    %vm670 = vcmp.eq.f32.partialorder %v669, 8.507059e+37
    %v671 = vand.u32 %v659, 2147483648
    %v672 = vor.u32 1.1754944e-38, %v671
    %v673 = vsel %vm670, %v672, %v668
    %v674 = vmul.f32 1.0, %v673
    %v675 = vadd.f32 %v614, %v639
    %v676 = vxor.u32 %v675, 2147483648
    %v677 = vmul.f32 %v676, 1.442695
    %v678 = vpow.pop %v677
    %v679 = vadd.f32 %v678, 1.0
    %v680 = vrcp.pop %v679
    %v681 = vmul.f32 %v679, %v680
    %v682 = vsub.f32 1.0, %v681
    %v683 = vmul.f32 %v680, %v682
    %v684 = vadd.f32 %v680, %v683
    %vm685 = vweird.f32 %v679
    %vm686 = vweird.f32 %v680
    %vm687 = vmor %vm685, %vm686
    %v688 = vsel %vm687, %v680, %v684
    %v689 = vand.u32 2147483647, %v679
    %vm690 = vcmp.eq.f32.partialorder %v689, 8.507059e+37
    %v691 = vand.u32 %v679, 2147483648
    %v692 = vor.u32 1.1754944e-38, %v691
    %v693 = vsel %vm690, %v692, %v688
    %v694 = vmul.f32 1.0, %v693
    %v695 = vadd.f32 %v652, %v318
    %v696 = vmul.f32 %v674, %v695
    %v697 = vadd.f32 %v615, %v696
    %v698 = vtanh.pop %v697
    %v699 = vsub.f32 1.0, %v694
    %v700 = vmul.f32 %v699, %v698
    %v701 = vmul.f32 %v694, %v608
    %v702 = vadd.f32 %v700, %v701
    %v703 = vpack.c.bf16 %v702, %v702
    %s704 = scalar_lea.vmem [#allocation8], 16
    %705 = vst [vmem:[%s704] sm:$0xf] %v703
    %s706 = scalar_lea.vmem [#allocation2], 120
    %v707 = vld [vmem:[%s706] sm:$0xff]
    %v708 = vld [vmem:[%s706 + $0x8] sm:$0xff]
    %v709 = vld [vmem:[%s706 + $0x10] sm:$0xff]
    %710 = vmatpush.bf16.msra.mxu0 %v211
    %711 = vmatpush.bf16.msra.mxu0 %v208
    %712 = vmatpush.bf16.msra.mxu0 %v205
    %713 = vmatpush.bf16.msra.mxu0 %v202
    %714 = vmatpush.bf16.msra.mxu0 %v199
    %715 = vmatpush.bf16.msra.mxu0 %v196
    %716 = vmatpush.bf16.msra.mxu0 %v193
    %717 = vmatpush.bf16.msra.mxu0 %v190
    %718 = vmatmul.bf16.gmra.mxu0 %v703
    %v719 = vpop.f32.mrf.mxu0
    %v720 = vadd.f32 0.0, %v719
    %v721 = vpop.f32.mrf.mxu0
    %722 = vdwg.mxu0
    %723 = vmatpush.bf16.msra.mxu0 %v212
    %724 = vmatpush.bf16.msra.mxu0 %v209
    %725 = vmatpush.bf16.msra.mxu0 %v206
    %726 = vmatpush.bf16.msra.mxu0 %v203
    %727 = vmatpush.bf16.msra.mxu0 %v200
    %728 = vmatpush.bf16.msra.mxu0 %v197
    %729 = vmatpush.bf16.msra.mxu0 %v194
    %730 = vmatpush.bf16.msra.mxu0 %v191
    %731 = vmatmul.bf16.gmra.mxu0 %v703
    %v732 = vpop.f32.mrf.mxu0
    %v733 = vadd.f32 0.0, %v732
    %v734 = vpop.f32.mrf.mxu0
    %735 = vdwg.mxu0
    %736 = vmatpush.bf16.msra.mxu0 %v213
    %737 = vmatpush.bf16.msra.mxu0 %v210
    %738 = vmatpush.bf16.msra.mxu0 %v207
    %739 = vmatpush.bf16.msra.mxu0 %v204
    %740 = vmatpush.bf16.msra.mxu0 %v201
    %741 = vmatpush.bf16.msra.mxu0 %v198
    %742 = vmatpush.bf16.msra.mxu0 %v195
    %743 = vmatpush.bf16.msra.mxu0 %v192
    %744 = vmatmul.bf16.gmra.mxu0 %v703
    %v745 = vpop.f32.mrf.mxu0
    %v746 = vadd.f32 0.0, %v745
    %v747 = vpop.f32.mrf.mxu0
    %748 = vdwg.mxu0
    %v749 = vadd.f32 %v707, %v720
    %v750 = vxor.u32 %v749, 2147483648
    %v751 = vmul.f32 %v750, 1.442695
    %v752 = vpow.pop %v751
    %v753 = vadd.f32 %v752, 1.0
    %v754 = vrcp.pop %v753
    %v755 = vmul.f32 %v753, %v754
    %v756 = vsub.f32 1.0, %v755
    %v757 = vmul.f32 %v754, %v756
    %v758 = vadd.f32 %v754, %v757
    %vm759 = vweird.f32 %v753
    %vm760 = vweird.f32 %v754
    %vm761 = vmor %vm759, %vm760
    %v762 = vsel %vm761, %v754, %v758
    %v763 = vand.u32 2147483647, %v753
    %vm764 = vcmp.eq.f32.partialorder %v763, 8.507059e+37
    %v765 = vand.u32 %v753, 2147483648
    %v766 = vor.u32 1.1754944e-38, %v765
    %v767 = vsel %vm764, %v766, %v762
    %v768 = vmul.f32 1.0, %v767
    %v769 = vadd.f32 %v708, %v733
    %v770 = vxor.u32 %v769, 2147483648
    %v771 = vmul.f32 %v770, 1.442695
    %v772 = vpow.pop %v771
    %v773 = vadd.f32 %v772, 1.0
    %v774 = vrcp.pop %v773
    %v775 = vmul.f32 %v773, %v774
    %v776 = vsub.f32 1.0, %v775
    %v777 = vmul.f32 %v774, %v776
    %v778 = vadd.f32 %v774, %v777
    %vm779 = vweird.f32 %v773
    %vm780 = vweird.f32 %v774
    %vm781 = vmor %vm779, %vm780
    %v782 = vsel %vm781, %v774, %v778
    %v783 = vand.u32 2147483647, %v773
    %vm784 = vcmp.eq.f32.partialorder %v783, 8.507059e+37
    %v785 = vand.u32 %v773, 2147483648
    %v786 = vor.u32 1.1754944e-38, %v785
    %v787 = vsel %vm784, %v786, %v782
    %v788 = vmul.f32 1.0, %v787
    %v789 = vadd.f32 %v746, %v318
    %v790 = vmul.f32 %v768, %v789
    %v791 = vadd.f32 %v709, %v790
    %v792 = vtanh.pop %v791
    %v793 = vsub.f32 1.0, %v788
    %v794 = vmul.f32 %v793, %v792
    %v795 = vmul.f32 %v788, %v702
    %v796 = vadd.f32 %v794, %v795
    %v797 = vpack.c.bf16 %v796, %v796
    %s798 = scalar_lea.vmem [#allocation8], 20
    %799 = vst [vmem:[%s798] sm:$0xf] %v797
    %s800 = scalar_lea.vmem [#allocation2], 144
    %v801 = vld [vmem:[%s800] sm:$0xff]
    %v802 = vld [vmem:[%s800 + $0x8] sm:$0xff]
    %v803 = vld [vmem:[%s800 + $0x10] sm:$0xff]
    %804 = vmatpush.bf16.msra.mxu0 %v211
    %805 = vmatpush.bf16.msra.mxu0 %v208
    %806 = vmatpush.bf16.msra.mxu0 %v205
    %807 = vmatpush.bf16.msra.mxu0 %v202
    %808 = vmatpush.bf16.msra.mxu0 %v199
    %809 = vmatpush.bf16.msra.mxu0 %v196
    %810 = vmatpush.bf16.msra.mxu0 %v193
    %811 = vmatpush.bf16.msra.mxu0 %v190
    %812 = vmatmul.bf16.gmra.mxu0 %v797
    %v813 = vpop.f32.mrf.mxu0
    %v814 = vadd.f32 0.0, %v813
    %v815 = vpop.f32.mrf.mxu0
    %816 = vdwg.mxu0
    %817 = vmatpush.bf16.msra.mxu0 %v212
    %818 = vmatpush.bf16.msra.mxu0 %v209
    %819 = vmatpush.bf16.msra.mxu0 %v206
    %820 = vmatpush.bf16.msra.mxu0 %v203
    %821 = vmatpush.bf16.msra.mxu0 %v200
    %822 = vmatpush.bf16.msra.mxu0 %v197
    %823 = vmatpush.bf16.msra.mxu0 %v194
    %824 = vmatpush.bf16.msra.mxu0 %v191
    %825 = vmatmul.bf16.gmra.mxu0 %v797
    %v826 = vpop.f32.mrf.mxu0
    %v827 = vadd.f32 0.0, %v826
    %v828 = vpop.f32.mrf.mxu0
    %829 = vdwg.mxu0
    %830 = vmatpush.bf16.msra.mxu0 %v213
    %831 = vmatpush.bf16.msra.mxu0 %v210
    %832 = vmatpush.bf16.msra.mxu0 %v207
    %833 = vmatpush.bf16.msra.mxu0 %v204
    %834 = vmatpush.bf16.msra.mxu0 %v201
    %835 = vmatpush.bf16.msra.mxu0 %v198
    %836 = vmatpush.bf16.msra.mxu0 %v195
    %837 = vmatpush.bf16.msra.mxu0 %v192
    %838 = vmatmul.bf16.gmra.mxu0 %v797
    %v839 = vpop.f32.mrf.mxu0
    %v840 = vadd.f32 0.0, %v839
    %v841 = vpop.f32.mrf.mxu0
    %842 = vdwg.mxu0
    %v843 = vadd.f32 %v801, %v814
    %v844 = vxor.u32 %v843, 2147483648
    %v845 = vmul.f32 %v844, 1.442695
    %v846 = vpow.pop %v845
    %v847 = vadd.f32 %v846, 1.0
    %v848 = vrcp.pop %v847
    %v849 = vmul.f32 %v847, %v848
    %v850 = vsub.f32 1.0, %v849
    %v851 = vmul.f32 %v848, %v850
    %v852 = vadd.f32 %v848, %v851
    %vm853 = vweird.f32 %v847
    %vm854 = vweird.f32 %v848
    %vm855 = vmor %vm853, %vm854
    %v856 = vsel %vm855, %v848, %v852
    %v857 = vand.u32 2147483647, %v847
    %vm858 = vcmp.eq.f32.partialorder %v857, 8.507059e+37
    %v859 = vand.u32 %v847, 2147483648
    %v860 = vor.u32 1.1754944e-38, %v859
    %v861 = vsel %vm858, %v860, %v856
    %v862 = vmul.f32 1.0, %v861
    %v863 = vadd.f32 %v802, %v827
    %v864 = vxor.u32 %v863, 2147483648
    %v865 = vmul.f32 %v864, 1.442695
    %v866 = vpow.pop %v865
    %v867 = vadd.f32 %v866, 1.0
    %v868 = vrcp.pop %v867
    %v869 = vmul.f32 %v867, %v868
    %v870 = vsub.f32 1.0, %v869
    %v871 = vmul.f32 %v868, %v870
    %v872 = vadd.f32 %v868, %v871
    %vm873 = vweird.f32 %v867
    %vm874 = vweird.f32 %v868
    %vm875 = vmor %vm873, %vm874
    %v876 = vsel %vm875, %v868, %v872
    %v877 = vand.u32 2147483647, %v867
    %vm878 = vcmp.eq.f32.partialorder %v877, 8.507059e+37
    %v879 = vand.u32 %v867, 2147483648
    %v880 = vor.u32 1.1754944e-38, %v879
    %v881 = vsel %vm878, %v880, %v876
    %v882 = vmul.f32 1.0, %v881
    %v883 = vadd.f32 %v840, %v318
    %v884 = vmul.f32 %v862, %v883
    %v885 = vadd.f32 %v803, %v884
    %v886 = vtanh.pop %v885
    %v887 = vsub.f32 1.0, %v882
    %v888 = vmul.f32 %v887, %v886
    %v889 = vmul.f32 %v882, %v796
    %v890 = vadd.f32 %v888, %v889
    %v891 = vpack.c.bf16 %v890, %v890
    %s892 = scalar_lea.vmem [#allocation8], 24
    %893 = vst [vmem:[%s892] sm:$0xf] %v891
    %s894 = scalar_lea.vmem [#allocation2], 168
    %v895 = vld [vmem:[%s894] sm:$0xff]
    %v896 = vld [vmem:[%s894 + $0x8] sm:$0xff]
    %v897 = vld [vmem:[%s894 + $0x10] sm:$0xff]
    %898 = vmatpush.bf16.msra.mxu0 %v211
    %899 = vmatpush.bf16.msra.mxu0 %v208
    %900 = vmatpush.bf16.msra.mxu0 %v205
    %901 = vmatpush.bf16.msra.mxu0 %v202
    %902 = vmatpush.bf16.msra.mxu0 %v199
    %903 = vmatpush.bf16.msra.mxu0 %v196
    %904 = vmatpush.bf16.msra.mxu0 %v193
    %905 = vmatpush.bf16.msra.mxu0 %v190
    %906 = vmatmul.bf16.gmra.mxu0 %v891
    %v907 = vpop.f32.mrf.mxu0
    %v908 = vadd.f32 0.0, %v907
    %v909 = vpop.f32.mrf.mxu0
    %910 = vdwg.mxu0
    %911 = vmatpush.bf16.msra.mxu0 %v212
    %912 = vmatpush.bf16.msra.mxu0 %v209
    %913 = vmatpush.bf16.msra.mxu0 %v206
    %914 = vmatpush.bf16.msra.mxu0 %v203
    %915 = vmatpush.bf16.msra.mxu0 %v200
    %916 = vmatpush.bf16.msra.mxu0 %v197
    %917 = vmatpush.bf16.msra.mxu0 %v194
    %918 = vmatpush.bf16.msra.mxu0 %v191
    %919 = vmatmul.bf16.gmra.mxu0 %v891
    %v920 = vpop.f32.mrf.mxu0
    %v921 = vadd.f32 0.0, %v920
    %v922 = vpop.f32.mrf.mxu0
    %923 = vdwg.mxu0
    %924 = vmatpush.bf16.msra.mxu0 %v213
    %925 = vmatpush.bf16.msra.mxu0 %v210
    %926 = vmatpush.bf16.msra.mxu0 %v207
    %927 = vmatpush.bf16.msra.mxu0 %v204
    %928 = vmatpush.bf16.msra.mxu0 %v201
    %929 = vmatpush.bf16.msra.mxu0 %v198
    %930 = vmatpush.bf16.msra.mxu0 %v195
    %931 = vmatpush.bf16.msra.mxu0 %v192
    %932 = vmatmul.bf16.gmra.mxu0 %v891
    %v933 = vpop.f32.mrf.mxu0
    %v934 = vadd.f32 0.0, %v933
    %v935 = vpop.f32.mrf.mxu0
    %936 = vdwg.mxu0
    %v937 = vadd.f32 %v895, %v908
    %v938 = vxor.u32 %v937, 2147483648
    %v939 = vmul.f32 %v938, 1.442695
    %v940 = vpow.pop %v939
    %v941 = vadd.f32 %v940, 1.0
    %v942 = vrcp.pop %v941
    %v943 = vmul.f32 %v941, %v942
    %v944 = vsub.f32 1.0, %v943
    %v945 = vmul.f32 %v942, %v944
    %v946 = vadd.f32 %v942, %v945
    %vm947 = vweird.f32 %v941
    %vm948 = vweird.f32 %v942
    %vm949 = vmor %vm947, %vm948
    %v950 = vsel %vm949, %v942, %v946
    %v951 = vand.u32 2147483647, %v941
    %vm952 = vcmp.eq.f32.partialorder %v951, 8.507059e+37
    %v953 = vand.u32 %v941, 2147483648
    %v954 = vor.u32 1.1754944e-38, %v953
    %v955 = vsel %vm952, %v954, %v950
    %v956 = vmul.f32 1.0, %v955
    %v957 = vadd.f32 %v896, %v921
    %v958 = vxor.u32 %v957, 2147483648
    %v959 = vmul.f32 %v958, 1.442695
    %v960 = vpow.pop %v959
    %v961 = vadd.f32 %v960, 1.0
    %v962 = vrcp.pop %v961
    %v963 = vmul.f32 %v961, %v962
    %v964 = vsub.f32 1.0, %v963
    %v965 = vmul.f32 %v962, %v964
    %v966 = vadd.f32 %v962, %v965
    %vm967 = vweird.f32 %v961
    %vm968 = vweird.f32 %v962
    %vm969 = vmor %vm967, %vm968
    %v970 = vsel %vm969, %v962, %v966
    %v971 = vand.u32 2147483647, %v961
    %vm972 = vcmp.eq.f32.partialorder %v971, 8.507059e+37
    %v973 = vand.u32 %v961, 2147483648
    %v974 = vor.u32 1.1754944e-38, %v973
    %v975 = vsel %vm972, %v974, %v970
    %v976 = vmul.f32 1.0, %v975
    %v977 = vadd.f32 %v934, %v318
    %v978 = vmul.f32 %v956, %v977
    %v979 = vadd.f32 %v897, %v978
    %v980 = vtanh.pop %v979
    %v981 = vsub.f32 1.0, %v976
    %v982 = vmul.f32 %v981, %v980
    %v983 = vmul.f32 %v976, %v890
    %v984 = vadd.f32 %v982, %v983
    %v985 = vpack.c.bf16 %v984, %v984
    %s986 = scalar_lea.vmem [#allocation8], 28
    %987 = vst [vmem:[%s986] sm:$0xf] %v985
    %988 = vst [vmem:[#allocation9] sm:$0xff] %v984
    // Predicated region
    $region34: #{tpu_custom_call.1} parent=1 // pred_check
      _
    $region35: #{tpu_custom_call.1} parent=1 // pred_check_branch
      %990 = sbr.rel (0) target = $region37
    $region36: #{tpu_custom_call.1} parent=1 // pred_region
      %992 = vsyncadd [#allocation4], 0
      %s993 = sshll.u32 [#allocation8], 4
      %s994 = int_to_ptr.vmem [resolvable:$true] %s993
      %s995 = sshll.u32 %s4, 4
      %s996 = int_to_ptr.hbm [resolvable:$true] %s995
      %1001 = dma.vmem_to_hbm [thread:$0]  %s994, 512, %s996, [#allocation4], 64, 64, 4
    $region37: #{tpu_custom_call.1} parent=1 // pred_fallthru
      _
    // Predicated region
    $region38: #{tpu_custom_call.1} parent=1 // pred_check
      _
    $region39: #{tpu_custom_call.1} parent=1 // pred_check_branch
      %1003 = sbr.rel (0) target = $region41
    $region40: #{tpu_custom_call.1} parent=1 // pred_region
      %1005 = vsyncadd [#allocation10], 0
      %s1007 = sshll.u32 [#allocation9], 4
      %s1008 = int_to_ptr.vmem [resolvable:$true] %s1007
      %s1009 = sshll.u32 %s5, 4
      %s1010 = int_to_ptr.hbm [resolvable:$true] %s1009
      %1012 = dma.vmem_to_hbm [thread:$0]  %s1008, 128, %s1010, [#allocation10]
    $region41: #{tpu_custom_call.1} parent=1 // pred_fallthru
      _
    // Predicated region
    $region42: #{tpu_custom_call.1} parent=1 // pred_check
      _
    $region43: #{tpu_custom_call.1} parent=1 // pred_check_branch
      %1014 = sbr.rel (0) target = $region45
    $region44: #{tpu_custom_call.1} parent=1 // pred_region
      %1016 = dma.done [#allocation4], 512
    $region45: #{tpu_custom_call.1} parent=1 // pred_fallthru
      _
    // Predicated region
    $region46: #{tpu_custom_call.1} parent=1 // pred_check
      _
    $region47: #{tpu_custom_call.1} parent=1 // pred_check_branch
      %1018 = sbr.rel (0) target = $region49
    $region48: #{tpu_custom_call.1} parent=1 // pred_region
      %1020 = dma.done [#allocation10], 128
    $region49: #{tpu_custom_call.1} parent=1 // pred_fallthru
      _
    %1021 = vsyncpa [#allocation3], 1
    %1022 = vsyncpa [#allocation6], 1
    %1023 = vsyncpa [#allocation4], 1
    %1024 = vsyncpa [#allocation10], 1

</llo_original>
